<compile_context>
chip_gen: v7x
topology: tpu7x:2x2x1
jax: 0.10.0
libtpu: 0.0.40
codegen_flags: <defaults>
</compile_context>

<pallas_src>
import math
import functools

import jax
import jax.numpy as jnp
from jax.experimental import pallas as pl
from jax.experimental.pallas import tpu as pltpu


def _round_up(x, m):
    return ((x + m - 1) // m) * m


# ------------------------------------------------------------------ kernel 1
def _project_kernel(h_ref, norm_ref, wcat_ref, brm_ref, bias_ref,
                    base_ref, hm_ref):
    hs = h_ref[...] * norm_ref[...]                          # (TP, Fin)   VPU
    proj = jnp.dot(hs, wcat_ref[...],
                   preferred_element_type=jnp.float32)       # (TP, 2*Fp)  MXU
    fp = hm_ref.shape[-1]
    # base = hs@W - (B @ r @ W_msg) * norm + bias
    base_ref[...] = proj[:, :fp] - brm_ref[...] * norm_ref[...] + bias_ref[...]
    # hm = hs @ W_msg, emitted bf16 (feeds kernel 2's full-rate bf16 MXU path)
    hm_ref[...] = proj[:, fp:].astype(jnp.bfloat16)


# ------------------------------------------------------------------ kernel 2
def _aggregate_kernel(a_ref, hm_ref, base_ref, norm_ref, o_ref, *,
                      tk, hm_resident):
    k = pl.program_id(1)

    # o_ref's block index is constant across k -> VMEM-resident accumulator.
    @pl.when(k == 0)
    def _init():
        o_ref[...] = jnp.zeros_like(o_ref)

    if hm_resident:
        off = pl.multiple_of(k * tk, 128)
        hm_k = hm_ref[pl.ds(off, tk), :]          # slice of the resident copy
    else:
        hm_k = hm_ref[...]                        # streamed (tk, Fp) tile

    # int8 A -> bf16 right before the dot (convert hidden under HBM-bound DMA);
    # bf16 x bf16 MXU with f32 accumulation = exact for integer edge counts.
    o_ref[...] += jnp.dot(a_ref[...].astype(jnp.bfloat16), hm_k,
                          preferred_element_type=jnp.float32)

    @pl.when(k == pl.num_programs(1) - 1)
    def _finalize():
        out = base_ref[...] + o_ref[...] * norm_ref[...]
        o_ref[...] = jnp.maximum(out, 0.0)        # activation = ReLU


# ------------------------------------------------------------------- wrapper
def _fit_rows(x, rows):
    if x.shape[0] == rows:
        return x
    if x.shape[0] > rows:
        return x[:rows]
    return jnp.pad(x, ((0, rows - x.shape[0]), (0, 0)))


@functools.partial(jax.jit, static_argnames=("tm", "tk"))
def compgcn_forward(h, norm, A, B, r, w_msg, w, bias, *, tm=None, tk=None):
    n, f_in = h.shape
    f_out = w.shape[1]
    fp = _round_up(f_out, 128)                    # lane-dense padded Fout
    f32 = jnp.float32
    n128 = _round_up(n, 128)

    # ---- tile selection (per-axis padding, no lcm blow-up) ----
    if tk is None:                                # A columns / contraction
        tk = n128 if n128 <= 512 else 512
    if tm is None:                                # A rows / output
        tm = 512 if n128 >= 1024 else (256 if n128 >= 512 else 128)
    assert tm % 128 == 0 and tk % 128 == 0
    tp = min(512, n128)                           # kernel-1 node tile
    n_pad_p = _round_up(n, tp)
    n_pad_m = _round_up(n, tm)                    # A rows / base / out
    n_pad_k = _round_up(n, tk)                    # A cols / hm rows

    def pad2(x, rr, cc):
        return jnp.pad(x, ((0, rr - x.shape[0]), (0, cc - x.shape[1])))

    # ---- tiny plain-JAX glue (O(N*F) or smaller) ----
    h_p = pad2(h.astype(f32), n_pad_p, f_in)
    norm_p = pad2(norm.astype(f32), n_pad_p, 1)
    rm = r.astype(f32) @ w_msg.astype(f32)               # (R, Fout)   tiny
    brm_p = pad2(B.astype(f32) @ rm, n_pad_p, fp)        # (N, Fout)   tiny
    wcat = jnp.concatenate([pad2(w.astype(f32), f_in, fp),
                            pad2(w_msg.astype(f32), f_in, fp)], axis=1)
    bias_p = pad2(bias.astype(f32).reshape(1, -1), 1, fp)
    # A holds integer edge multiplicities; int8 halves the dominant O(N^2)
    # HBM stream vs bf16.  Exact only for multiplicity <= 127.
    a_p = pad2(A, n_pad_m, n_pad_k).astype(jnp.int8)

    gp = n_pad_p // tp
    gm = n_pad_m // tm
    gk = n_pad_k // tk

    # ---- pass 1: per-node projection, fused [W | W_msg] matmul + base fold ----
    proj_cost = pl.CostEstimate(
        flops=int(2 * n_pad_p * f_in * 2 * fp),
        transcendentals=0,
        bytes_accessed=int(4 * n_pad_p * f_in + 4 * n_pad_p
                           + 4 * f_in * 2 * fp + 4 * n_pad_p * fp + 4 * fp
                           + 4 * n_pad_p * fp + 2 * n_pad_p * fp))
    base, hm = pl.pallas_call(
        _project_kernel,
        out_shape=(jax.ShapeDtypeStruct((n_pad_p, fp), f32),
                   jax.ShapeDtypeStruct((n_pad_p, fp), jnp.bfloat16)),
        grid_spec=pltpu.PrefetchScalarGridSpec(
            num_scalar_prefetch=0,
            grid=(gp,),
            in_specs=[
                pl.BlockSpec((tp, f_in), lambda i: (i, 0)),      # h
                pl.BlockSpec((tp, 1), lambda i: (i, 0)),         # norm
                pl.BlockSpec((f_in, 2 * fp), lambda i: (0, 0)),  # [W | W_msg]
                pl.BlockSpec((tp, fp), lambda i: (i, 0)),        # Brm
                pl.BlockSpec((1, fp), lambda i: (0, 0)),         # bias
            ],
            out_specs=[
                pl.BlockSpec((tp, fp), lambda i: (i, 0)),        # base
                pl.BlockSpec((tp, fp), lambda i: (i, 0)),        # hm (bf16)
            ]),
        compiler_params=pltpu.CompilerParams(
            dimension_semantics=("parallel",),
            vmem_limit_bytes=32 * 1024 * 1024),
        cost_estimate=proj_cost,
    )(h_p, norm_p, wcat, brm_p, bias_p)

    # per-axis padded row counts for kernel 2 (cheap O(N*fp) slice/pad)
    base = _fit_rows(base, n_pad_m)
    hm = _fit_rows(hm, n_pad_k)
    norm_m = pad2(norm.astype(f32), n_pad_m, 1)

    # ---- pass 2: tiled A @ hm, accumulate in resident output, fused epilogue ----
    hm_bytes = n_pad_k * fp * 2
    # keep the full hm VMEM-resident (loaded once) when it fits the budget
    hm_resident = 2 * hm_bytes <= 24 * 1024 * 1024   # 2 pipeline buffers, v7x-safe
    if hm_resident:
        hm_spec = pl.BlockSpec((n_pad_k, fp), lambda i, k: (0, 0))
    else:
        hm_spec = pl.BlockSpec((tk, fp), lambda i, k: (k, 0))

    agg_cost = pl.CostEstimate(
        flops=int(2 * n_pad_m * n_pad_k * fp),
        transcendentals=0,
        bytes_accessed=int(n_pad_m * n_pad_k                       # int8 A
                           + (1 if hm_resident else gm) * hm_bytes  # hm traffic
                           + 4 * n_pad_m * fp                      # base
                           + 4 * n_pad_m                           # norm
                           + 4 * n_pad_m * fp))                    # out
    out = pl.pallas_call(
        functools.partial(_aggregate_kernel, tk=tk, hm_resident=hm_resident),
        out_shape=jax.ShapeDtypeStruct((n_pad_m, fp), f32),
        grid_spec=pltpu.PrefetchScalarGridSpec(
            num_scalar_prefetch=0,
            grid=(gm, gk),
            in_specs=[
                pl.BlockSpec((tm, tk), lambda i, k: (i, k)),     # A (int8)
                hm_spec,                                         # hm (bf16)
                pl.BlockSpec((tm, fp), lambda i, k: (i, 0)),     # base
                pl.BlockSpec((tm, 1), lambda i, k: (i, 0)),      # norm
            ],
            out_specs=pl.BlockSpec((tm, fp), lambda i, k: (i, 0))),
        compiler_params=pltpu.CompilerParams(
            dimension_semantics=("parallel", "arbitrary"),
            vmem_limit_bytes=48 * 1024 * 1024),                  # <= v7x 64 MiB
        cost_estimate=agg_cost,
    )(a_p, hm, base, norm_m)

    return out[:n, :f_out]


def reference_forward(h, norm, r, src, dst, rel, w_msg, w, bias, n_nodes):
    # pure-JAX edge-level reference (matches the PyTorch/DGL semantics)
    hs = h * norm
    msg = (hs[src] - r[rel]) @ w_msg
    h0 = jnp.zeros((n_nodes, w_msg.shape[1]), jnp.float32).at[dst].add(msg)
    out = hs @ w + h0 * norm + bias[0]
    return jnp.maximum(out, 0.0)


if __name__ == "__main__":
    key = jax.random.PRNGKey(0)

    N, R, E = 384, 4, 2048          # nodes, relations, edges
    F_IN, F_OUT = 32, 32

    k = jax.random.split(key, 8)
    h = jax.random.normal(k[0], (N, F_IN), jnp.float32)
    r = jax.random.normal(k[1], (R, F_IN), jnp.float32)
    # per-node norm (like DGL's 1/deg), shape (N, 1)
    norm = jax.random.uniform(k[2], (N, 1), jnp.float32, 0.1, 1.0)

    # random synthetic graph
    src = jax.random.randint(k[3], (E,), 0, N)
    dst = jax.random.randint(k[4], (E,), 0, N)
    rel = jax.random.randint(k[5], (E,), 0, R)

    # deterministic parameter init, same rule as reset_parameters()
    stdv = 1.0 / math.sqrt(F_OUT)
    w_msg = jax.random.uniform(k[6], (F_IN, F_OUT), jnp.float32, -stdv, stdv)
    kw, kb = jax.random.split(k[7])
    w = jax.random.uniform(kw, (F_IN, F_OUT), jnp.float32, -stdv, stdv)
    bias = jax.random.uniform(kb, (1, F_OUT), jnp.float32, -stdv, stdv)

    # dense incidence matrices (edge multiplicities here are tiny, << 127)
    A = jnp.zeros((N, N), jnp.float32).at[dst, src].add(1.0)
    B = jnp.zeros((N, R), jnp.float32).at[dst, rel].add(1.0)

    out = compgcn_forward(h, norm, A, B, r, w_msg, w, bias)
    out = jax.block_until_ready(out)

    ref = reference_forward(h, norm, r, src, dst, rel, w_msg, w, bias, N)
    assert out.shape == (N, F_OUT)
    max_err = float(jnp.max(jnp.abs(out - ref)))
    # hm is streamed/multiplied in bf16 (review-recommended); tolerance widened
    # from the f32 1e-3 accordingly (bf16 relative rounding ~ 2^-8).
    assert jnp.allclose(out, ref, atol=3e-2, rtol=3e-2), f"mismatch: {max_err}"

    print("KERNEL_OK")
</pallas_src>

<mosaic_0001>
module attributes {stable_mosaic.version = 11 : i64} {
  func.func @_aggregate_kernel(%arg0: i32, %arg1: i32, %arg2: memref<128x384xi8, #tpu.memory_space<vmem>>, %arg3: memref<384x128xbf16, #tpu.memory_space<vmem>>, %arg4: memref<128x128xf32, #tpu.memory_space<vmem>>, %arg5: memref<128x1xf32, #tpu.memory_space<vmem>>, %arg6: memref<128x128xf32, #tpu.memory_space<vmem>>) attributes {dimension_semantics = [#tpu.dimension_semantics<parallel>, #tpu.dimension_semantics<arbitrary>], iteration_bounds = array<i64: 3, 1>, scalar_prefetch = 0 : i64, scratch_operands = 0 : i64, tpu.core_type = #tpu.core_type<tc>, window_params = [{transform_indices = @transform_0, window_bounds = array<i64: 128, 384>}, {pipeline_mode = #tpu.pipeline_mode<synchronous>, transform_indices = @transform_1, window_bounds = array<i64: 384, 128>}, {transform_indices = @transform_2, window_bounds = array<i64: 128, 128>}, {transform_indices = @transform_3, window_bounds = array<i64: 128, 1>}, {transform_indices = @transform_4, window_bounds = array<i64: 128, 128>}]} {
    %c0_i32 = arith.constant 0 : i32
    %0 = arith.cmpi eq, %arg1, %c0_i32 : i32
    %1 = arith.extui %0 : i1 to i32
    %c0_i32_0 = arith.constant 0 : i32
    %2 = arith.cmpi ne, %1, %c0_i32_0 : i32
    scf.if %2 {
      %cst_9 = arith.constant 0.000000e+00 : f32
      %16 = vector.broadcast %cst_9 : f32 to vector<128x128xf32>
      %c0_10 = arith.constant 0 : index
      %c0_11 = arith.constant 0 : index
      %17 = vector.load %arg6[%c0_10, %c0_11] : memref<128x128xf32, #tpu.memory_space<vmem>>, vector<128x128xf32>
      tpu.vector_store %arg6[%c0_10, %c0_11], %16 {strides = array<i32>} : memref<128x128xf32, #tpu.memory_space<vmem>>, vector<128x128xf32>,
    } else {
    }
    %c384_i32 = arith.constant 384 : i32
    %3 = arith.muli %arg1, %c384_i32 : i32
    %4 = tpu.assume_multiple %3, 128 : i32
    %5 = arith.index_cast %4 : i32 to index
    %c0 = arith.constant 0 : index
    %6 = vector.load %arg3[%5, %c0] : memref<384x128xbf16, #tpu.memory_space<vmem>>, vector<384x128xbf16>
    %c0_1 = arith.constant 0 : index
    %c0_2 = arith.constant 0 : index
    %7 = vector.load %arg6[%c0_1, %c0_2] : memref<128x128xf32, #tpu.memory_space<vmem>>, vector<128x128xf32>
    %c0_3 = arith.constant 0 : index
    %c0_4 = arith.constant 0 : index
    %8 = vector.load %arg2[%c0_3, %c0_4] : memref<128x384xi8, #tpu.memory_space<vmem>>, vector<128x384xi8>
    %9 = arith.sitofp %8 : vector<128x384xi8> to vector<128x384xbf16>
    %cst = arith.constant dense<0.000000e+00> : vector<128x128xf32>
    %10 = tpu.matmul %9, %6, %cst {dimension_numbers = #tpu.dot_dimension_numbers<[1], [0], [0], [1], [0, 0, 1, 1], [], []>} : vector<128x384xbf16>, vector<384x128xbf16>, vector<128x128xf32> -> vector<128x128xf32>
    %11 = arith.addf %7, %10 : vector<128x128xf32>
    %c0_5 = arith.constant 0 : index
    %c0_6 = arith.constant 0 : index
    %12 = vector.load %arg6[%c0_5, %c0_6] : memref<128x128xf32, #tpu.memory_space<vmem>>, vector<128x128xf32>
    tpu.vector_store %arg6[%c0_5, %c0_6], %11 {strides = array<i32>} : memref<128x128xf32, #tpu.memory_space<vmem>>, vector<128x128xf32>,
    %c0_i32_7 = arith.constant 0 : i32
    %13 = arith.cmpi eq, %arg1, %c0_i32_7 : i32
    %14 = arith.extui %13 : i1 to i32
    %c0_i32_8 = arith.constant 0 : i32
    %15 = arith.cmpi ne, %14, %c0_i32_8 : i32
    scf.if %15 {
      %c0_9 = arith.constant 0 : index
      %c0_10 = arith.constant 0 : index
      %16 = vector.load %arg4[%c0_9, %c0_10] : memref<128x128xf32, #tpu.memory_space<vmem>>, vector<128x128xf32>
      %c0_11 = arith.constant 0 : index
      %c0_12 = arith.constant 0 : index
      %17 = vector.load %arg6[%c0_11, %c0_12] : memref<128x128xf32, #tpu.memory_space<vmem>>, vector<128x128xf32>
      %c0_13 = arith.constant 0 : index
      %c0_14 = arith.constant 0 : index
      %18 = vector.load %arg5[%c0_13, %c0_14] : memref<128x1xf32, #tpu.memory_space<vmem>>, vector<128x1xf32>
      %19 = vector.broadcast %18 : vector<128x1xf32> to vector<128x128xf32>
      %20 = arith.mulf %17, %19 : vector<128x128xf32>
      %21 = arith.addf %16, %20 : vector<128x128xf32>
      %cst_15 = arith.constant 0.000000e+00 : f32
      %22 = vector.broadcast %cst_15 : f32 to vector<128x128xf32>
      %23 = arith.maximumf %21, %22 : vector<128x128xf32>
      %c0_16 = arith.constant 0 : index
      %c0_17 = arith.constant 0 : index
      %24 = vector.load %arg6[%c0_16, %c0_17] : memref<128x128xf32, #tpu.memory_space<vmem>>, vector<128x128xf32>
      tpu.vector_store %arg6[%c0_16, %c0_17], %23 {strides = array<i32>} : memref<128x128xf32, #tpu.memory_space<vmem>>, vector<128x128xf32>,
    } else {
    }
    return
  }
  func.func @transform_0(%arg0: i32, %arg1: i32) -> (i32, i32) {
    %c0_i32 = arith.constant 0 : i32
    return %arg0, %arg1 : i32, i32
  }
  func.func @transform_1(%arg0: i32, %arg1: i32) -> (i32, i32) {
    %c0_i32 = arith.constant 0 : i32
    %c0_i32_0 = arith.constant 0 : i32
    %c0_i32_1 = arith.constant 0 : i32
    return %c0_i32, %c0_i32_0 : i32, i32
  }
  func.func @transform_2(%arg0: i32, %arg1: i32) -> (i32, i32) {
    %c0_i32 = arith.constant 0 : i32
    %c0_i32_0 = arith.constant 0 : i32
    return %arg0, %c0_i32 : i32, i32
  }
  func.func @transform_3(%arg0: i32, %arg1: i32) -> (i32, i32) {
    %c0_i32 = arith.constant 0 : i32
    %c0_i32_0 = arith.constant 0 : i32
    return %arg0, %c0_i32 : i32, i32
  }
  func.func @transform_4(%arg0: i32, %arg1: i32) -> (i32, i32) {
    %c0_i32 = arith.constant 0 : i32
    %c0_i32_0 = arith.constant 0 : i32
    return %arg0, %c0_i32 : i32, i32
  }
}

module attributes {stable_mosaic.version = 11 : i64} {
  func.func @_project_kernel(%arg0: i32, %arg1: memref<384x32xf32, #tpu.memory_space<vmem>>, %arg2: memref<384x1xf32, #tpu.memory_space<vmem>>, %arg3: memref<32x256xf32, #tpu.memory_space<vmem>>, %arg4: memref<384x128xf32, #tpu.memory_space<vmem>>, %arg5: memref<1x128xf32, #tpu.memory_space<vmem>>, %arg6: memref<384x128xf32, #tpu.memory_space<vmem>>, %arg7: memref<384x128xbf16, #tpu.memory_space<vmem>>) attributes {dimension_semantics = [#tpu.dimension_semantics<parallel>], iteration_bounds = array<i64: 1>, scalar_prefetch = 0 : i64, scratch_operands = 0 : i64, tpu.core_type = #tpu.core_type<tc>, window_params = [{transform_indices = @transform_0, window_bounds = array<i64: 384, 32>}, {transform_indices = @transform_1, window_bounds = array<i64: 384, 1>}, {pipeline_mode = #tpu.pipeline_mode<synchronous>, transform_indices = @transform_2, window_bounds = array<i64: 32, 256>}, {transform_indices = @transform_3, window_bounds = array<i64: 384, 128>}, {pipeline_mode = #tpu.pipeline_mode<synchronous>, transform_indices = @transform_4, window_bounds = array<i64: 1, 128>}, {transform_indices = @transform_5, window_bounds = array<i64: 384, 128>}, {transform_indices = @transform_6, window_bounds = array<i64: 384, 128>}]} {
    %c0 = arith.constant 0 : index
    %c0_0 = arith.constant 0 : index
    %0 = vector.load %arg1[%c0, %c0_0] : memref<384x32xf32, #tpu.memory_space<vmem>>, vector<384x32xf32>
    %c0_1 = arith.constant 0 : index
    %c0_2 = arith.constant 0 : index
    %1 = vector.load %arg2[%c0_1, %c0_2] : memref<384x1xf32, #tpu.memory_space<vmem>>, vector<384x1xf32>
    %2 = vector.broadcast %1 : vector<384x1xf32> to vector<384x32xf32>
    %3 = arith.mulf %0, %2 : vector<384x32xf32>
    %c0_3 = arith.constant 0 : index
    %c0_4 = arith.constant 0 : index
    %4 = vector.load %arg3[%c0_3, %c0_4] : memref<32x256xf32, #tpu.memory_space<vmem>>, vector<32x256xf32>
    %cst = arith.constant dense<0.000000e+00> : vector<384x256xf32>
    %5 = tpu.matmul %3, %4, %cst {dimension_numbers = #tpu.dot_dimension_numbers<[1], [0], [0], [1], [0, 0, 1, 1], [], []>} : vector<384x32xf32>, vector<32x256xf32>, vector<384x256xf32> -> vector<384x256xf32>
    %6 = vector.extract_strided_slice %5 {offsets = [0, 0], sizes = [384, 128], strides = [1, 1]} : vector<384x256xf32> to vector<384x128xf32>
    %c0_5 = arith.constant 0 : index
    %c0_6 = arith.constant 0 : index
    %7 = vector.load %arg4[%c0_5, %c0_6] : memref<384x128xf32, #tpu.memory_space<vmem>>, vector<384x128xf32>
    %c0_7 = arith.constant 0 : index
    %c0_8 = arith.constant 0 : index
    %8 = vector.load %arg2[%c0_7, %c0_8] : memref<384x1xf32, #tpu.memory_space<vmem>>, vector<384x1xf32>
    %9 = vector.broadcast %8 : vector<384x1xf32> to vector<384x128xf32>
    %10 = arith.mulf %7, %9 : vector<384x128xf32>
    %11 = arith.subf %6, %10 : vector<384x128xf32>
    %c0_9 = arith.constant 0 : index
    %c0_10 = arith.constant 0 : index
    %12 = vector.load %arg5[%c0_9, %c0_10] : memref<1x128xf32, #tpu.memory_space<vmem>>, vector<1x128xf32>
    %13 = vector.broadcast %12 : vector<1x128xf32> to vector<384x128xf32>
    %14 = arith.addf %11, %13 : vector<384x128xf32>
    %c0_11 = arith.constant 0 : index
    %c0_12 = arith.constant 0 : index
    %15 = vector.load %arg6[%c0_11, %c0_12] : memref<384x128xf32, #tpu.memory_space<vmem>>, vector<384x128xf32>
    tpu.vector_store %arg6[%c0_11, %c0_12], %14 {strides = array<i32>} : memref<384x128xf32, #tpu.memory_space<vmem>>, vector<384x128xf32>,
    %16 = vector.extract_strided_slice %5 {offsets = [0, 128], sizes = [384, 128], strides = [1, 1]} : vector<384x256xf32> to vector<384x128xf32>
    %17 = arith.truncf %16 : vector<384x128xf32> to vector<384x128xbf16>
    %c0_13 = arith.constant 0 : index
    %c0_14 = arith.constant 0 : index
    %18 = vector.load %arg7[%c0_13, %c0_14] : memref<384x128xbf16, #tpu.memory_space<vmem>>, vector<384x128xbf16>
    tpu.vector_store %arg7[%c0_13, %c0_14], %17 {strides = array<i32>} : memref<384x128xbf16, #tpu.memory_space<vmem>>, vector<384x128xbf16>,
    return
  }
  func.func @transform_0(%arg0: i32) -> (i32, i32) {
    %c0_i32 = arith.constant 0 : i32
    %c0_i32_0 = arith.constant 0 : i32
    return %arg0, %c0_i32 : i32, i32
  }
  func.func @transform_1(%arg0: i32) -> (i32, i32) {
    %c0_i32 = arith.constant 0 : i32
    %c0_i32_0 = arith.constant 0 : i32
    return %arg0, %c0_i32 : i32, i32
  }
  func.func @transform_2(%arg0: i32) -> (i32, i32) {
    %c0_i32 = arith.constant 0 : i32
    %c0_i32_0 = arith.constant 0 : i32
    %c0_i32_1 = arith.constant 0 : i32
    return %c0_i32, %c0_i32_0 : i32, i32
  }
  func.func @transform_3(%arg0: i32) -> (i32, i32) {
    %c0_i32 = arith.constant 0 : i32
    %c0_i32_0 = arith.constant 0 : i32
    return %arg0, %c0_i32 : i32, i32
  }
  func.func @transform_4(%arg0: i32) -> (i32, i32) {
    %c0_i32 = arith.constant 0 : i32
    %c0_i32_0 = arith.constant 0 : i32
    %c0_i32_1 = arith.constant 0 : i32
    return %c0_i32, %c0_i32_0 : i32, i32
  }
  func.func @transform_5(%arg0: i32) -> (i32, i32) {
    %c0_i32 = arith.constant 0 : i32
    %c0_i32_0 = arith.constant 0 : i32
    return %arg0, %c0_i32 : i32, i32
  }
  func.func @transform_6(%arg0: i32) -> (i32, i32) {
    %c0_i32 = arith.constant 0 : i32
    %c0_i32_0 = arith.constant 0 : i32
    return %arg0, %c0_i32 : i32, i32
  }
}

</mosaic_0001>

<llo_original>
// kernel: compgcn_forward.3
$region0: #{compgcn_forward.3}
  #allocation0 [shape = 'u32[]', space=smem, size = 0x4, offset = 0x4, fixed_abs, tag = 'smem constant byte address 0x4 - core index']
  #allocation1 [shape = 'u32[144,128]{1,0:T(1,128)}', space=vmem, size = 0x12000, scoped, tag = 'internal scratch']
  %s0 = inlined_call_operand.vmem [shape: s8[384,384], index: 0, kind: input, shape index: {}]
  %s1 = inlined_call_operand.vmem [shape: bf16[384,128], index: 1, kind: input, shape index: {}]
  %s2 = inlined_call_operand.vmem [shape: f32[384,128], index: 2, kind: input, shape index: {}]
  %s3 = inlined_call_operand.vmem [shape: f32[384,1], index: 3, kind: input, shape index: {}]
  %s4 = inlined_call_operand.vmem [shape: f32[384,128], index: 4, kind: output, shape index: {}]
  %s5 = sld [smem:[#allocation0]]
  $region57: #{compgcn_forward.3} parent=0
    _
  %s7 = ssub.s32 1, %s5
  %s8 = scalar_select 0, %s7, %s5
  loop: start=0, step=1, limit=5
  $region2: #{compgcn_forward.3} parent=0 // loop_pre_header
    _
  $region3: #{compgcn_forward.3} parent=0 // loop_header
    %s10 = sphi 0, %s14
    %p11 = scmp.ge.s32.totalorder %s10, 5
    %s17 = sphi 0, %s29
    %s18 = sphi 0, %s25
    %s19 = sphi 0, %s17
    %s20 = sphi 0, %s18
    %s21 = sphi 0, %s19
    %s22 = sphi 0, %s20
    %s34 = sphi 0, %s36
    %s37 = sphi 0, %s34
    %s38 = sphi 0, %s37
    %s54 = sphi 0, %s38
    %s58 = sphi 0, %s58
    %s60 = sphi 0, %s58
    %s61 = sphi 0, %s60
    %s75 = sphi 0, %s61
    %s81 = sphi 0, %s83
    %s84 = sphi 0, %s81
    %s85 = sphi 0, %s84
    %s101 = sphi 0, %s85
    %s107 = sphi 0, %s109
    %s110 = sphi 0, %s107
    %s111 = sphi 0, %s110
    %s127 = sphi 0, %s111
    %s133 = sphi 0, %s135
    %s136 = sphi 0, %s133
    %s137 = sphi 0, %s136
    %s153 = sphi 0, %s137
  $region4: #{compgcn_forward.3} parent=0 // loop_header_branch
    %13 = sbr.rel (%p11) target = $region8
  $region5: #{compgcn_forward.3} parent=0 // loop_body
    %s15 = ssub.s32 %s10, 1
    %s16 = ssub.s32 %s10, 2
    %s23 = sadd.s32 1, %s18
    %p24 = scmp.ge.s32.totalorder %s23, 1
    %s25 = scalar_select %p24, 0, %s23
    %s26 = sadd.s32 1, %s17
    %s27 = scalar_select %p24, %s26, %s17
    %p28 = scmp.ge.s32.totalorder %s27, 3
    %s29 = scalar_select %p28, 0, %s27
    %s30 = ssub.s32 %s17, %s29
    %s31 = ssub.s32 %s18, %s25
    %s32 = sor.u32 %s30, %s31
    %p33 = scmp.eq.s32.totalorder %s32, 0
    %s35 = sadd.s32 %s34, 1
    %s36 = scalar_select %p33, %s34, %s35
    %p39 = pneg %p33
    %p40 = scmp.eq.s32.totalorder %s10, 2
    %p41 = por %p39, %p40
    %p42 = scmp.ne.s32.totalorder %s34, %s37
    %p43 = scmp.eq.s32.totalorder %s10, 0
    %p44 = por %p42, %p43
    %p45 = scmp.ne.s32.totalorder %s34, %s37
    %p46 = scmp.eq.s32.totalorder %s15, 2
    %p47 = por %p45, %p46
    %p48 = scmp.ne.s32.totalorder %s37, %s38
    %p49 = scmp.eq.s32.totalorder %s15, 0
    %p50 = por %p48, %p49
    %p51 = scmp.ne.s32.totalorder %s37, %s38
    %p52 = scmp.eq.s32.totalorder %s16, 2
    %p53 = por %p51, %p52
    %p55 = scmp.ne.s32.totalorder %s38, %s54
    %p56 = scmp.eq.s32.totalorder %s16, 0
    %p57 = por %p55, %p56
    %s59 = sadd.s32 %s58, 1
    %p62 = scmp.eq.s32.totalorder %s10, 2
    %p63 = scmp.ne.s32.totalorder %s58, %s60
    %p64 = scmp.eq.s32.totalorder %s10, 0
    %p65 = por %p63, %p64
    %p66 = scmp.ne.s32.totalorder %s58, %s60
    %p67 = scmp.eq.s32.totalorder %s15, 2
    %p68 = por %p66, %p67
    %p69 = scmp.ne.s32.totalorder %s60, %s61
    %p70 = scmp.eq.s32.totalorder %s15, 0
    %p71 = por %p69, %p70
    %p72 = scmp.ne.s32.totalorder %s60, %s61
    %p73 = scmp.eq.s32.totalorder %s16, 2
    %p74 = por %p72, %p73
    %p76 = scmp.ne.s32.totalorder %s61, %s75
    %p77 = scmp.eq.s32.totalorder %s16, 0
    %p78 = por %p76, %p77
    %s79 = ssub.s32 %s17, %s29
    %p80 = scmp.eq.s32.totalorder %s79, 0
    %s82 = sadd.s32 %s81, 1
    %s83 = scalar_select %p80, %s81, %s82
    %p86 = pneg %p80
    %p87 = scmp.eq.s32.totalorder %s10, 2
    %p88 = por %p86, %p87
    %p89 = scmp.ne.s32.totalorder %s81, %s84
    %p90 = scmp.eq.s32.totalorder %s10, 0
    %p91 = por %p89, %p90
    %p92 = scmp.ne.s32.totalorder %s81, %s84
    %p93 = scmp.eq.s32.totalorder %s15, 2
    %p94 = por %p92, %p93
    %p95 = scmp.ne.s32.totalorder %s84, %s85
    %p96 = scmp.eq.s32.totalorder %s15, 0
    %p97 = por %p95, %p96
    %p98 = scmp.ne.s32.totalorder %s84, %s85
    %p99 = scmp.eq.s32.totalorder %s16, 2
    %p100 = por %p98, %p99
    %p102 = scmp.ne.s32.totalorder %s85, %s101
    %p103 = scmp.eq.s32.totalorder %s16, 0
    %p104 = por %p102, %p103
    %s105 = ssub.s32 %s17, %s29
    %p106 = scmp.eq.s32.totalorder %s105, 0
    %s108 = sadd.s32 %s107, 1
    %s109 = scalar_select %p106, %s107, %s108
    %p112 = pneg %p106
    %p113 = scmp.eq.s32.totalorder %s10, 2
    %p114 = por %p112, %p113
    %p115 = scmp.ne.s32.totalorder %s107, %s110
    %p116 = scmp.eq.s32.totalorder %s10, 0
    %p117 = por %p115, %p116
    %p118 = scmp.ne.s32.totalorder %s107, %s110
    %p119 = scmp.eq.s32.totalorder %s15, 2
    %p120 = por %p118, %p119
    %p121 = scmp.ne.s32.totalorder %s110, %s111
    %p122 = scmp.eq.s32.totalorder %s15, 0
    %p123 = por %p121, %p122
    %p124 = scmp.ne.s32.totalorder %s110, %s111
    %p125 = scmp.eq.s32.totalorder %s16, 2
    %p126 = por %p124, %p125
    %p128 = scmp.ne.s32.totalorder %s111, %s127
    %p129 = scmp.eq.s32.totalorder %s16, 0
    %p130 = por %p128, %p129
    %s131 = ssub.s32 %s17, %s29
    %p132 = scmp.eq.s32.totalorder %s131, 0
    %s134 = sadd.s32 %s133, 1
    %s135 = scalar_select %p132, %s133, %s134
    %p138 = pneg %p132
    %p139 = scmp.eq.s32.totalorder %s10, 2
    %p140 = por %p138, %p139
    %p141 = scmp.ne.s32.totalorder %s133, %s136
    %p142 = scmp.eq.s32.totalorder %s10, 0
    %p143 = por %p141, %p142
    %p144 = scmp.ne.s32.totalorder %s133, %s136
    %p145 = scmp.eq.s32.totalorder %s15, 2
    %p146 = por %p144, %p145
    %p147 = scmp.ne.s32.totalorder %s136, %s137
    %p148 = scmp.eq.s32.totalorder %s15, 0
    %p149 = por %p147, %p148
    %p150 = scmp.ne.s32.totalorder %s136, %s137
    %p151 = scmp.eq.s32.totalorder %s16, 2
    %p152 = por %p150, %p151
    %p154 = scmp.ne.s32.totalorder %s137, %s153
    %p155 = scmp.eq.s32.totalorder %s16, 0
    %p156 = por %p154, %p155
    %p157 = scmp.le.s32.totalorder 1, %s10
    %p158 = scmp.lt.s32.totalorder %s10, 4
    %p159 = pnand %p157, %p158
    %p160 = pneg %p159
    // Predicated region
    $region9: #{compgcn_forward.3} parent=5 // pred_check
      _
    $region10: #{compgcn_forward.3} parent=5 // pred_check_branch
      %162 = sbr.rel (%p159) target = $region12
    $region11: #{compgcn_forward.3} parent=5 // pred_region
      %s163 = ssub.s32 %s10, 1
      // Predicated region
      $region13: #{compgcn_forward.3} parent=11 // pred_check
        %p164 = pneg %p71
      $region14: #{compgcn_forward.3} parent=11 // pred_check_branch
        %166 = sbr.rel (%p164) target = $region16
      $region15: #{compgcn_forward.3} parent=11 // pred_region
        _
      $region16: #{compgcn_forward.3} parent=11 // pred_fallthru
        _
    $region12: #{compgcn_forward.3} parent=5 // pred_fallthru
      _
    %p167 = scmp.lt.s32.totalorder %s10, 3
    // Predicated region
    $region17: #{compgcn_forward.3} parent=5 // pred_check
      %p168 = pneg %p167
    $region18: #{compgcn_forward.3} parent=5 // pred_check_branch
      %170 = sbr.rel (%p168) target = $region20
    $region19: #{compgcn_forward.3} parent=5 // pred_region
      // Predicated region
      $region21: #{compgcn_forward.3} parent=19 // pred_check
        %p171 = pneg %p44
      $region22: #{compgcn_forward.3} parent=19 // pred_check_branch
        %173 = sbr.rel (%p171) target = $region24
      $region23: #{compgcn_forward.3} parent=19 // pred_region
        %s174 = smul.u32 4, %s17
        %s175 = smul.u32 3, %s18
        %p176 = scmp.lt.s32.totalorder %s174, 11
        %s177 = scalar_select %p176, %s174, 11
        %p178 = scmp.lt.s32.totalorder %s175, 2
        %s179 = scalar_select %p178, %s175, 2
        %s180 = smul.addr %s177, 3
        %s181 = sadd.s32 %s179, %s180
        %s182 = smul.addr %s181, 8
        %s183 = scalar_lea.vmem %s0, %s182
        %s184 = smul.u32 4, %s17
        %s185 = smul.u32 3, %s18
      $region24: #{compgcn_forward.3} parent=19 // pred_fallthru
        _
      // Predicated region
      $region25: #{compgcn_forward.3} parent=19 // pred_check
        %p186 = pneg %p91
      $region26: #{compgcn_forward.3} parent=19 // pred_check_branch
        %188 = sbr.rel (%p186) target = $region28
      $region27: #{compgcn_forward.3} parent=19 // pred_region
        %s189 = smul.u32 16, %s17
        %p190 = scmp.lt.s32.totalorder %s189, 47
        %s191 = scalar_select %p190, %s189, 47
        %s192 = smul.addr %s191, 8
        %s193 = scalar_lea.vmem %s2, %s192
        %s194 = smul.u32 16, %s17
      $region28: #{compgcn_forward.3} parent=19 // pred_fallthru
        _
      // Predicated region
      $region29: #{compgcn_forward.3} parent=19 // pred_check
        %p195 = pneg %p117
      $region30: #{compgcn_forward.3} parent=19 // pred_check_branch
        %197 = sbr.rel (%p195) target = $region32
      $region31: #{compgcn_forward.3} parent=19 // pred_region
        %s198 = smul.u32 16, %s17
        %p199 = scmp.lt.s32.totalorder %s198, 47
        %s200 = scalar_select %p199, %s198, 47
        %s201 = smul.addr %s200, 8
        %s202 = scalar_lea.vmem %s3, %s201
        %s203 = smul.u32 16, %s17
      $region32: #{compgcn_forward.3} parent=19 // pred_fallthru
        _
    $region20: #{compgcn_forward.3} parent=5 // pred_fallthru
      _
    %p204 = scmp.le.s32.totalorder 1, %s10
    %p205 = scmp.lt.s32.totalorder %s10, 4
    %p206 = pnand %p204, %p205
    %p207 = pneg %p206
    // Predicated region
    $region33: #{compgcn_forward.3} parent=5 // pred_check
      _
    $region34: #{compgcn_forward.3} parent=5 // pred_check_branch
      %209 = sbr.rel (%p206) target = $region36
    $region35: #{compgcn_forward.3} parent=5 // pred_region
      %s210 = ssub.s32 %s10, 1
      %s211 = smul.u32 4, %s19
      %s212 = smul.u32 3, %s20
      %p213 = scmp.lt.s32.totalorder %s211, 11
      %s214 = scalar_select %p213, %s211, 11
      %p215 = scmp.lt.s32.totalorder %s212, 2
      %s216 = scalar_select %p215, %s212, 2
      %s217 = smul.addr %s214, 3
      %s218 = sadd.s32 %s216, %s217
      %s219 = smul.addr %s218, 8
      %s220 = scalar_lea.vmem %s0, %s219
      %p221 = pneg %p50
      %p222 = pneg %p47
      %p223 = pneg %p71
      %p224 = pneg %p68
      %s225 = smul.u32 16, %s19
      %p226 = scmp.lt.s32.totalorder %s225, 47
      %s227 = scalar_select %p226, %s225, 47
      %s228 = smul.addr %s227, 8
      %s229 = scalar_lea.vmem %s2, %s228
      %p230 = pneg %p97
      %p231 = pneg %p94
      %s232 = smul.u32 16, %s19
      %p233 = scmp.lt.s32.totalorder %s232, 47
      %s234 = scalar_select %p233, %s232, 47
      %s235 = smul.addr %s234, 8
      %s236 = scalar_lea.vmem %s3, %s235
      %p237 = pneg %p123
      %p238 = pneg %p120
      %p239 = pneg %p149
      %p240 = pneg %p146
      %s241 = smul.u32 16, %s19
      %p242 = scmp.lt.s32.totalorder %s241, 47
      %s243 = scalar_select %p242, %s241, 47
      %s244 = smul.addr %s243, 8
      %s245 = scalar_lea.vmem %s4, %s244
      %s246 = smul.u32 4, %s19
      %s247 = smul.u32 3, %s20
      %p248 = scmp.lt.s32.totalorder %s246, 11
      %s249 = scalar_select %p248, %s246, 11
      %p250 = scmp.lt.s32.totalorder %s247, 2
      %s251 = scalar_select %p250, %s247, 2
      %s252 = smul.addr %s249, 3
      %s253 = sadd.s32 %s251, %s252
      %s254 = smul.addr %s253, 8
      %s255 = scalar_lea.vmem %s0, %s254
      %s256 = smul.u32 4, %s19
      %s257 = smul.u32 3, %s20
      %s258 = smul.u32 16, %s19
      %p259 = scmp.lt.s32.totalorder %s258, 47
      %s260 = scalar_select %p259, %s258, 47
      %s261 = smul.addr %s260, 8
      %s262 = scalar_lea.vmem %s2, %s261
      %s263 = smul.u32 16, %s19
      %s264 = smul.u32 16, %s19
      %p265 = scmp.lt.s32.totalorder %s264, 47
      %s266 = scalar_select %p265, %s264, 47
      %s267 = smul.addr %s266, 8
      %s268 = scalar_lea.vmem %s3, %s267
      %s269 = smul.u32 16, %s19
      %s270 = smul.u32 16, %s19
      %p271 = scmp.lt.s32.totalorder %s270, 47
      %s272 = scalar_select %p271, %s270, 47
      %s273 = smul.addr %s272, 8
      %s274 = scalar_lea.vmem %s4, %s273
      %s275 = smul.u32 16, %s19
      %p277 = scmp.eq.s32.totalorder %s20, 0
      // Predicated region
      $region37: #{compgcn_forward.3} parent=35 // pred_check
        %p278 = pneg %p277
      $region38: #{compgcn_forward.3} parent=35 // pred_check_branch
        %280 = sbr.rel (%p278) target = $region40
      $region39: #{compgcn_forward.3} parent=35 // pred_region
        %281 = vst [vmem:[%s274] sm:$0xff] 0.0
        %282 = vst [vmem:[%s274 + $0x8] sm:$0xff] 0.0
        %283 = vst [vmem:[%s274 + $0x10] sm:$0xff] 0.0
        %284 = vst [vmem:[%s274 + $0x18] sm:$0xff] 0.0
        %285 = vst [vmem:[%s274 + $0x20] sm:$0xff] 0.0
        %286 = vst [vmem:[%s274 + $0x28] sm:$0xff] 0.0
        %287 = vst [vmem:[%s274 + $0x30] sm:$0xff] 0.0
        %288 = vst [vmem:[%s274 + $0x38] sm:$0xff] 0.0
        %289 = vst [vmem:[%s274 + $0x40] sm:$0xff] 0.0
        %290 = vst [vmem:[%s274 + $0x48] sm:$0xff] 0.0
        %291 = vst [vmem:[%s274 + $0x50] sm:$0xff] 0.0
        %292 = vst [vmem:[%s274 + $0x58] sm:$0xff] 0.0
        %293 = vst [vmem:[%s274 + $0x60] sm:$0xff] 0.0
        %294 = vst [vmem:[%s274 + $0x68] sm:$0xff] 0.0
        %295 = vst [vmem:[%s274 + $0x70] sm:$0xff] 0.0
        %296 = vst [vmem:[%s274 + $0x78] sm:$0xff] 0.0
      $region40: #{compgcn_forward.3} parent=35 // pred_fallthru
        _
      %s297 = smul.u32 %s20, 384
      %s298 = sshra.s32 %s297, 3
      %s299 = sand.u32 %s297, 7
      %s300 = smul.addr %s298, 4
      %s301 = scalar_lea.vmem %s1, %s300
      %v302 = vld [vmem:[%s301] sm:$0xf]
      %v303 = vld [vmem:[%s301 + $0x4] sm:$0xf]
      %v304 = vld [vmem:[%s301 + $0x8] sm:$0xf]
      %v305 = vld [vmem:[%s301 + $0xc] sm:$0xf]
      %v306 = vld [vmem:[%s301 + $0x10] sm:$0xf]
      %v307 = vld [vmem:[%s301 + $0x14] sm:$0xf]
      %v308 = vld [vmem:[%s301 + $0x18] sm:$0xf]
      %v309 = vld [vmem:[%s301 + $0x1c] sm:$0xf]
      %v310 = vld [vmem:[%s301 + $0x20] sm:$0xf]
      %v311 = vld [vmem:[%s301 + $0x24] sm:$0xf]
      %v312 = vld [vmem:[%s301 + $0x28] sm:$0xf]
      %v313 = vld [vmem:[%s301 + $0x2c] sm:$0xf]
      %v314 = vld [vmem:[%s301 + $0x30] sm:$0xf]
      %v315 = vld [vmem:[%s301 + $0x34] sm:$0xf]
      %v316 = vld [vmem:[%s301 + $0x38] sm:$0xf]
      %v317 = vld [vmem:[%s301 + $0x3c] sm:$0xf]
      %v318 = vld [vmem:[%s301 + $0x40] sm:$0xf]
      %v319 = vld [vmem:[%s301 + $0x44] sm:$0xf]
      %v320 = vld [vmem:[%s301 + $0x48] sm:$0xf]
      %v321 = vld [vmem:[%s301 + $0x4c] sm:$0xf]
      %v322 = vld [vmem:[%s301 + $0x50] sm:$0xf]
      %v323 = vld [vmem:[%s301 + $0x54] sm:$0xf]
      %v324 = vld [vmem:[%s301 + $0x58] sm:$0xf]
      %v325 = vld [vmem:[%s301 + $0x5c] sm:$0xf]
      %v326 = vld [vmem:[%s301 + $0x60] sm:$0xf]
      %v327 = vld [vmem:[%s301 + $0x64] sm:$0xf]
      %v328 = vld [vmem:[%s301 + $0x68] sm:$0xf]
      %v329 = vld [vmem:[%s301 + $0x6c] sm:$0xf]
      %v330 = vld [vmem:[%s301 + $0x70] sm:$0xf]
      %v331 = vld [vmem:[%s301 + $0x74] sm:$0xf]
      %v332 = vld [vmem:[%s301 + $0x78] sm:$0xf]
      %v333 = vld [vmem:[%s301 + $0x7c] sm:$0xf]
      %v334 = vld [vmem:[%s301 + $0x80] sm:$0xf]
      %v335 = vld [vmem:[%s301 + $0x84] sm:$0xf]
      %v336 = vld [vmem:[%s301 + $0x88] sm:$0xf]
      %v337 = vld [vmem:[%s301 + $0x8c] sm:$0xf]
      %v338 = vld [vmem:[%s301 + $0x90] sm:$0xf]
      %v339 = vld [vmem:[%s301 + $0x94] sm:$0xf]
      %v340 = vld [vmem:[%s301 + $0x98] sm:$0xf]
      %v341 = vld [vmem:[%s301 + $0x9c] sm:$0xf]
      %v342 = vld [vmem:[%s301 + $0xa0] sm:$0xf]
      %v343 = vld [vmem:[%s301 + $0xa4] sm:$0xf]
      %v344 = vld [vmem:[%s301 + $0xa8] sm:$0xf]
      %v345 = vld [vmem:[%s301 + $0xac] sm:$0xf]
      %v346 = vld [vmem:[%s301 + $0xb0] sm:$0xf]
      %v347 = vld [vmem:[%s301 + $0xb4] sm:$0xf]
      %v348 = vld [vmem:[%s301 + $0xb8] sm:$0xf]
      %v349 = vld [vmem:[%s301 + $0xbc] sm:$0xf]
      %v350 = vld [vmem:[%s274] sm:$0xff]
      %v351 = vld [vmem:[%s274 + $0x8] sm:$0xff]
      %v352 = vld [vmem:[%s274 + $0x10] sm:$0xff]
      %v353 = vld [vmem:[%s274 + $0x18] sm:$0xff]
      %v354 = vld [vmem:[%s274 + $0x20] sm:$0xff]
      %v355 = vld [vmem:[%s274 + $0x28] sm:$0xff]
      %v356 = vld [vmem:[%s274 + $0x30] sm:$0xff]
      %v357 = vld [vmem:[%s274 + $0x38] sm:$0xff]
      %v358 = vld [vmem:[%s274 + $0x40] sm:$0xff]
      %v359 = vld [vmem:[%s274 + $0x48] sm:$0xff]
      %v360 = vld [vmem:[%s274 + $0x50] sm:$0xff]
      %v361 = vld [vmem:[%s274 + $0x58] sm:$0xff]
      %v362 = vld [vmem:[%s274 + $0x60] sm:$0xff]
      %v363 = vld [vmem:[%s274 + $0x68] sm:$0xff]
      %v364 = vld [vmem:[%s274 + $0x70] sm:$0xff]
      %v365 = vld [vmem:[%s274 + $0x78] sm:$0xff]
      %v366 = vld [vmem:[%s255] sm:$0xff]
      %v367 = vld [vmem:[%s255 + $0x8] sm:$0xff]
      %v368 = vld [vmem:[%s255 + $0x10] sm:$0xff]
      %v369 = vld [vmem:[%s255 + $0x18] sm:$0xff]
      %v370 = vld [vmem:[%s255 + $0x20] sm:$0xff]
      %v371 = vld [vmem:[%s255 + $0x28] sm:$0xff]
      %v372 = vld [vmem:[%s255 + $0x30] sm:$0xff]
      %v373 = vld [vmem:[%s255 + $0x38] sm:$0xff]
      %v374 = vld [vmem:[%s255 + $0x40] sm:$0xff]
      %v375 = vld [vmem:[%s255 + $0x48] sm:$0xff]
      %v376 = vld [vmem:[%s255 + $0x50] sm:$0xff]
      %v377 = vld [vmem:[%s255 + $0x58] sm:$0xff]
      %v378 = vunpack.c.l.s8.bf16 %v366
      %v379 = vunpack.c.l.s8.bf16 %v367
      %v380 = vunpack.c.l.s8.bf16 %v368
      %v381 = vunpack.c.h.s8.bf16 %v366
      %v382 = vunpack.c.h.s8.bf16 %v367
      %v383 = vunpack.c.h.s8.bf16 %v368
      %v384 = vunpack.c.l.s8.bf16 %v369
      %v385 = vunpack.c.l.s8.bf16 %v370
      %v386 = vunpack.c.l.s8.bf16 %v371
      %v387 = vunpack.c.h.s8.bf16 %v369
      %v388 = vunpack.c.h.s8.bf16 %v370
      %v389 = vunpack.c.h.s8.bf16 %v371
      %v390 = vunpack.c.l.s8.bf16 %v372
      %v391 = vunpack.c.l.s8.bf16 %v373
      %v392 = vunpack.c.l.s8.bf16 %v374
      %v393 = vunpack.c.h.s8.bf16 %v372
      %v394 = vunpack.c.h.s8.bf16 %v373
      %v395 = vunpack.c.h.s8.bf16 %v374
      %v396 = vunpack.c.l.s8.bf16 %v375
      %v397 = vunpack.c.l.s8.bf16 %v376
      %v398 = vunpack.c.l.s8.bf16 %v377
      %v399 = vunpack.c.h.s8.bf16 %v375
      %v400 = vunpack.c.h.s8.bf16 %v376
      %v401 = vunpack.c.h.s8.bf16 %v377
      %v450 = vunpack.c.l.b16 %v302
      %v451 = vunpack.c.l.b16 %v303
      %v452 = vunpack.c.l.b16 %v304
      %v453 = vunpack.c.l.b16 %v305
      %v454 = vunpack.c.l.b16 %v306
      %v455 = vunpack.c.l.b16 %v307
      %v456 = vunpack.c.l.b16 %v308
      %v457 = vunpack.c.l.b16 %v309
      %v458 = vunpack.c.l.b16 %v310
      %v459 = vunpack.c.l.b16 %v311
      %v460 = vunpack.c.l.b16 %v312
      %v461 = vunpack.c.l.b16 %v313
      %v462 = vunpack.c.l.b16 %v314
      %v463 = vunpack.c.l.b16 %v315
      %v464 = vunpack.c.l.b16 %v316
      %v465 = vunpack.c.l.b16 %v317
      %v466 = vunpack.c.l.b16 %v318
      %v467 = vunpack.c.l.b16 %v319
      %v468 = vunpack.c.l.b16 %v320
      %v469 = vunpack.c.l.b16 %v321
      %v470 = vunpack.c.l.b16 %v322
      %v471 = vunpack.c.l.b16 %v323
      %v472 = vunpack.c.l.b16 %v324
      %v473 = vunpack.c.l.b16 %v325
      %v474 = vunpack.c.l.b16 %v326
      %v475 = vunpack.c.l.b16 %v327
      %v476 = vunpack.c.l.b16 %v328
      %v477 = vunpack.c.l.b16 %v329
      %v478 = vunpack.c.l.b16 %v330
      %v479 = vunpack.c.l.b16 %v331
      %v480 = vunpack.c.l.b16 %v332
      %v481 = vunpack.c.l.b16 %v333
      %v482 = vunpack.c.l.b16 %v334
      %v483 = vunpack.c.l.b16 %v335
      %v484 = vunpack.c.l.b16 %v336
      %v485 = vunpack.c.l.b16 %v337
      %v486 = vunpack.c.l.b16 %v338
      %v487 = vunpack.c.l.b16 %v339
      %v488 = vunpack.c.l.b16 %v340
      %v489 = vunpack.c.l.b16 %v341
      %v490 = vunpack.c.l.b16 %v342
      %v491 = vunpack.c.l.b16 %v343
      %v492 = vunpack.c.l.b16 %v344
      %v493 = vunpack.c.l.b16 %v345
      %v494 = vunpack.c.l.b16 %v346
      %v495 = vunpack.c.l.b16 %v347
      %v496 = vunpack.c.l.b16 %v348
      %v497 = vunpack.c.l.b16 %v349
      %v498 = vpack.c.b16 %v451, %v450
      %v499 = vpack.c.b16 %v453, %v452
      %v500 = vpack.c.b16 %v455, %v454
      %v501 = vpack.c.b16 %v457, %v456
      %v502 = vpack.c.b16 %v459, %v458
      %v503 = vpack.c.b16 %v461, %v460
      %v504 = vpack.c.b16 %v463, %v462
      %v505 = vpack.c.b16 %v465, %v464
      %v506 = vpack.c.b16 %v467, %v466
      %v507 = vpack.c.b16 %v469, %v468
      %v508 = vpack.c.b16 %v471, %v470
      %v509 = vpack.c.b16 %v473, %v472
      %v510 = vpack.c.b16 %v475, %v474
      %v511 = vpack.c.b16 %v477, %v476
      %v512 = vpack.c.b16 %v479, %v478
      %v513 = vpack.c.b16 %v481, %v480
      %v514 = vpack.c.b16 %v483, %v482
      %v515 = vpack.c.b16 %v485, %v484
      %v516 = vpack.c.b16 %v487, %v486
      %v517 = vpack.c.b16 %v489, %v488
      %v518 = vpack.c.b16 %v491, %v490
      %v519 = vpack.c.b16 %v493, %v492
      %v520 = vpack.c.b16 %v495, %v494
      %v521 = vpack.c.b16 %v497, %v496
      %546 = vmatprep.subr.bf16.mxu0 0
      %547 = vmatpush1.bf16.msra.mxu0 %v498
      %548 = vmatprep.subr.bf16.mxu0 0
      %549 = vmatpush1.bf16.msra.mxu0 %v499
      %550 = vmatprep.subr.bf16.mxu0 0
      %551 = vmatpush1.bf16.msra.mxu0 %v500
      %552 = vmatprep.subr.bf16.mxu0 0
      %553 = vmatpush1.bf16.msra.mxu0 %v501
      %554 = vmatprep.subr.bf16.mxu0 0
      %555 = vmatpush1.bf16.msra.mxu0 %v502
      %556 = vmatprep.subr.bf16.mxu0 0
      %557 = vmatpush1.bf16.msra.mxu0 %v503
      %558 = vmatprep.subr.bf16.mxu0 0
      %559 = vmatpush1.bf16.msra.mxu0 %v504
      %560 = vmatprep.subr.bf16.mxu0 0
      %561 = vmatpush1.bf16.msra.mxu0 %v505
      %562 = vmatprep.subr.bf16.mxu0 0
      %563 = vmatpush1.bf16.msra.mxu0 %v506
      %564 = vmatprep.subr.bf16.mxu0 0
      %565 = vmatpush1.bf16.msra.mxu0 %v507
      %566 = vmatprep.subr.bf16.mxu0 0
      %567 = vmatpush1.bf16.msra.mxu0 %v508
      %568 = vmatprep.subr.bf16.mxu0 0
      %569 = vmatpush1.bf16.msra.mxu0 %v509
      %570 = vmatprep.subr.bf16.mxu0 0
      %571 = vmatpush1.bf16.msra.mxu0 %v510
      %572 = vmatprep.subr.bf16.mxu0 0
      %573 = vmatpush1.bf16.msra.mxu0 %v511
      %574 = vmatprep.subr.bf16.mxu0 0
      %575 = vmatpush1.bf16.msra.mxu0 %v512
      %576 = vmatprep.subr.bf16.mxu0 0
      %577 = vmatpush1.bf16.msra.mxu0 %v513
      %578 = vmatprep.mubr.bf16.mxu0 %v379
      %579 = vmatmul.mubr.bf16.gmra.mrb[0].mxu0 %v378
      %v580 = vpop.f32.mrb[0].mxu0
      %v581 = vadd.f32 0.0, %v580
      %v582 = vpop.f32.mrb[0].mxu0
      %v583 = vpop.f32.mrb[0].mxu0
      %v584 = vadd.f32 0.0, %v583
      %v585 = vpop.f32.mrb[0].mxu0
      %586 = vmatprep.mubr.bf16.mxu0 %v382
      %587 = vmatmul.mubr.bf16.gmra.mrb[0].mxu0 %v381
      %v588 = vpop.f32.mrb[0].mxu0
      %v589 = vadd.f32 0.0, %v588
      %v590 = vpop.f32.mrb[0].mxu0
      %v591 = vpop.f32.mrb[0].mxu0
      %v592 = vadd.f32 0.0, %v591
      %v593 = vpop.f32.mrb[0].mxu0
      %594 = vmatprep.mubr.bf16.mxu0 %v385
      %595 = vmatmul.mubr.bf16.gmra.mrb[0].mxu0 %v384
      %v596 = vpop.f32.mrb[0].mxu0
      %v597 = vadd.f32 0.0, %v596
      %v598 = vpop.f32.mrb[0].mxu0
      %v599 = vpop.f32.mrb[0].mxu0
      %v600 = vadd.f32 0.0, %v599
      %v601 = vpop.f32.mrb[0].mxu0
      %602 = vmatprep.mubr.bf16.mxu0 %v388
      %603 = vmatmul.mubr.bf16.gmra.mrb[0].mxu0 %v387
      %v604 = vpop.f32.mrb[0].mxu0
      %v605 = vadd.f32 0.0, %v604
      %v606 = vpop.f32.mrb[0].mxu0
      %v607 = vpop.f32.mrb[0].mxu0
      %v608 = vadd.f32 0.0, %v607
      %v609 = vpop.f32.mrb[0].mxu0
      %610 = vmatprep.mubr.bf16.mxu0 %v391
      %611 = vmatmul.mubr.bf16.gmra.mrb[0].mxu0 %v390
      %v612 = vpop.f32.mrb[0].mxu0
      %v613 = vadd.f32 0.0, %v612
      %v614 = vpop.f32.mrb[0].mxu0
      %v615 = vpop.f32.mrb[0].mxu0
      %v616 = vadd.f32 0.0, %v615
      %v617 = vpop.f32.mrb[0].mxu0
      %618 = vmatprep.mubr.bf16.mxu0 %v394
      %619 = vmatmul.mubr.bf16.gmra.mrb[0].mxu0 %v393
      %v620 = vpop.f32.mrb[0].mxu0
      %v621 = vadd.f32 0.0, %v620
      %v622 = vpop.f32.mrb[0].mxu0
      %v623 = vpop.f32.mrb[0].mxu0
      %v624 = vadd.f32 0.0, %v623
      %v625 = vpop.f32.mrb[0].mxu0
      %626 = vmatprep.mubr.bf16.mxu0 %v397
      %627 = vmatmul.mubr.bf16.gmra.mrb[0].mxu0 %v396
      %v628 = vpop.f32.mrb[0].mxu0
      %v629 = vadd.f32 0.0, %v628
      %v630 = vpop.f32.mrb[0].mxu0
      %v631 = vpop.f32.mrb[0].mxu0
      %v632 = vadd.f32 0.0, %v631
      %v633 = vpop.f32.mrb[0].mxu0
      %634 = vmatprep.mubr.bf16.mxu0 %v400
      %635 = vmatmul.mubr.bf16.gmra.mrb[0].mxu0 %v399
      %v636 = vpop.f32.mrb[0].mxu0
      %v637 = vadd.f32 0.0, %v636
      %v638 = vpop.f32.mrb[0].mxu0
      %v639 = vpop.f32.mrb[0].mxu0
      %v640 = vadd.f32 0.0, %v639
      %v641 = vpop.f32.mrb[0].mxu0
      %642 = vdwg.mxu0
      %643 = vmatprep.subr.bf16.mxu0 0
      %644 = vmatpush1.bf16.msra.mxu0 %v514
      %645 = vmatprep.subr.bf16.mxu0 0
      %646 = vmatpush1.bf16.msra.mxu0 %v515
      %647 = vmatprep.subr.bf16.mxu0 0
      %648 = vmatpush1.bf16.msra.mxu0 %v516
      %649 = vmatprep.subr.bf16.mxu0 0
      %650 = vmatpush1.bf16.msra.mxu0 %v517
      %651 = vmatprep.subr.bf16.mxu0 0
      %652 = vmatpush1.bf16.msra.mxu0 %v518
      %653 = vmatprep.subr.bf16.mxu0 0
      %654 = vmatpush1.bf16.msra.mxu0 %v519
      %655 = vmatprep.subr.bf16.mxu0 0
      %656 = vmatpush1.bf16.msra.mxu0 %v520
      %657 = vmatprep.subr.bf16.mxu0 0
      %658 = vmatpush1.bf16.msra.mxu0 %v521
      %659 = vmatprep.subr.bf16.mxu0 0
      %660 = vmatpush1.bf16.msra.mxu0 0
      %661 = vmatprep.subr.bf16.mxu0 0
      %662 = vmatpush1.bf16.msra.mxu0 0
      %663 = vmatprep.subr.bf16.mxu0 0
      %664 = vmatpush1.bf16.msra.mxu0 0
      %665 = vmatprep.subr.bf16.mxu0 0
      %666 = vmatpush1.bf16.msra.mxu0 0
      %667 = vmatprep.subr.bf16.mxu0 0
      %668 = vmatpush1.bf16.msra.mxu0 0
      %669 = vmatprep.subr.bf16.mxu0 0
      %670 = vmatpush1.bf16.msra.mxu0 0
      %671 = vmatprep.subr.bf16.mxu0 0
      %672 = vmatpush1.bf16.msra.mxu0 0
      %673 = vmatprep.subr.bf16.mxu0 0
      %674 = vmatpush1.bf16.msra.mxu0 0
      %675 = vmatprep.mubr.bf16.mxu0 0
      %676 = vmatmul.mubr.bf16.gmra.mrb[0].mxu0 %v380
      %v677 = vpop.f32.mrb[0].mxu0
      %v678 = vadd.f32 %v581, %v677
      %v679 = vpop.f32.mrb[0].mxu0
      %v680 = vpop.f32.mrb[0].mxu0
      %v681 = vadd.f32 %v584, %v680
      %v682 = vpop.f32.mrb[0].mxu0
      %683 = vmatprep.mubr.bf16.mxu0 0
      %684 = vmatmul.mubr.bf16.gmra.mrb[0].mxu0 %v383
      %v685 = vpop.f32.mrb[0].mxu0
      %v686 = vadd.f32 %v589, %v685
      %v687 = vpop.f32.mrb[0].mxu0
      %v688 = vpop.f32.mrb[0].mxu0
      %v689 = vadd.f32 %v592, %v688
      %v690 = vpop.f32.mrb[0].mxu0
      %691 = vmatprep.mubr.bf16.mxu0 0
      %692 = vmatmul.mubr.bf16.gmra.mrb[0].mxu0 %v386
      %v693 = vpop.f32.mrb[0].mxu0
      %v694 = vadd.f32 %v597, %v693
      %v695 = vpop.f32.mrb[0].mxu0
      %v696 = vpop.f32.mrb[0].mxu0
      %v697 = vadd.f32 %v600, %v696
      %v698 = vpop.f32.mrb[0].mxu0
      %699 = vmatprep.mubr.bf16.mxu0 0
      %700 = vmatmul.mubr.bf16.gmra.mrb[0].mxu0 %v389
      %v701 = vpop.f32.mrb[0].mxu0
      %v702 = vadd.f32 %v605, %v701
      %v703 = vpop.f32.mrb[0].mxu0
      %v704 = vpop.f32.mrb[0].mxu0
      %v705 = vadd.f32 %v608, %v704
      %v706 = vpop.f32.mrb[0].mxu0
      %707 = vmatprep.mubr.bf16.mxu0 0
      %708 = vmatmul.mubr.bf16.gmra.mrb[0].mxu0 %v392
      %v709 = vpop.f32.mrb[0].mxu0
      %v710 = vadd.f32 %v613, %v709
      %v711 = vpop.f32.mrb[0].mxu0
      %v712 = vpop.f32.mrb[0].mxu0
      %v713 = vadd.f32 %v616, %v712
      %v714 = vpop.f32.mrb[0].mxu0
      %715 = vmatprep.mubr.bf16.mxu0 0
      %716 = vmatmul.mubr.bf16.gmra.mrb[0].mxu0 %v395
      %v717 = vpop.f32.mrb[0].mxu0
      %v718 = vadd.f32 %v621, %v717
      %v719 = vpop.f32.mrb[0].mxu0
      %v720 = vpop.f32.mrb[0].mxu0
      %v721 = vadd.f32 %v624, %v720
      %v722 = vpop.f32.mrb[0].mxu0
      %723 = vmatprep.mubr.bf16.mxu0 0
      %724 = vmatmul.mubr.bf16.gmra.mrb[0].mxu0 %v398
      %v725 = vpop.f32.mrb[0].mxu0
      %v726 = vadd.f32 %v629, %v725
      %v727 = vpop.f32.mrb[0].mxu0
      %v728 = vpop.f32.mrb[0].mxu0
      %v729 = vadd.f32 %v632, %v728
      %v730 = vpop.f32.mrb[0].mxu0
      %731 = vmatprep.mubr.bf16.mxu0 0
      %732 = vmatmul.mubr.bf16.gmra.mrb[0].mxu0 %v401
      %v733 = vpop.f32.mrb[0].mxu0
      %v734 = vadd.f32 %v637, %v733
      %v735 = vpop.f32.mrb[0].mxu0
      %v736 = vpop.f32.mrb[0].mxu0
      %v737 = vadd.f32 %v640, %v736
      %v738 = vpop.f32.mrb[0].mxu0
      %739 = vdwg.mxu0
      %v740 = vadd.f32 %v350, %v678
      %v741 = vadd.f32 %v351, %v681
      %v742 = vadd.f32 %v352, %v686
      %v743 = vadd.f32 %v353, %v689
      %v744 = vadd.f32 %v354, %v694
      %v745 = vadd.f32 %v355, %v697
      %v746 = vadd.f32 %v356, %v702
      %v747 = vadd.f32 %v357, %v705
      %v748 = vadd.f32 %v358, %v710
      %v749 = vadd.f32 %v359, %v713
      %v750 = vadd.f32 %v360, %v718
      %v751 = vadd.f32 %v361, %v721
      %v752 = vadd.f32 %v362, %v726
      %v753 = vadd.f32 %v363, %v729
      %v754 = vadd.f32 %v364, %v734
      %v755 = vadd.f32 %v365, %v737
      %756 = vst [vmem:[%s274] sm:$0xff] %v740
      %757 = vst [vmem:[%s274 + $0x8] sm:$0xff] %v741
      %758 = vst [vmem:[%s274 + $0x10] sm:$0xff] %v742
      %759 = vst [vmem:[%s274 + $0x18] sm:$0xff] %v743
      %760 = vst [vmem:[%s274 + $0x20] sm:$0xff] %v744
      %761 = vst [vmem:[%s274 + $0x28] sm:$0xff] %v745
      %762 = vst [vmem:[%s274 + $0x30] sm:$0xff] %v746
      %763 = vst [vmem:[%s274 + $0x38] sm:$0xff] %v747
      %764 = vst [vmem:[%s274 + $0x40] sm:$0xff] %v748
      %765 = vst [vmem:[%s274 + $0x48] sm:$0xff] %v749
      %766 = vst [vmem:[%s274 + $0x50] sm:$0xff] %v750
      %767 = vst [vmem:[%s274 + $0x58] sm:$0xff] %v751
      %768 = vst [vmem:[%s274 + $0x60] sm:$0xff] %v752
      %769 = vst [vmem:[%s274 + $0x68] sm:$0xff] %v753
      %770 = vst [vmem:[%s274 + $0x70] sm:$0xff] %v754
      %771 = vst [vmem:[%s274 + $0x78] sm:$0xff] %v755
      // Predicated region
      $region41: #{compgcn_forward.3} parent=35 // pred_check
        %p772 = pneg %p277
      $region42: #{compgcn_forward.3} parent=35 // pred_check_branch
        %774 = sbr.rel (%p772) target = $region44
      $region43: #{compgcn_forward.3} parent=35 // pred_region
        %v775 = vld [vmem:[%s262] sm:$0xff]
        %v776 = vld [vmem:[%s262 + $0x8] sm:$0xff]
        %v777 = vld [vmem:[%s262 + $0x10] sm:$0xff]
        %v778 = vld [vmem:[%s262 + $0x18] sm:$0xff]
        %v779 = vld [vmem:[%s262 + $0x20] sm:$0xff]
        %v780 = vld [vmem:[%s262 + $0x28] sm:$0xff]
        %v781 = vld [vmem:[%s262 + $0x30] sm:$0xff]
        %v782 = vld [vmem:[%s262 + $0x38] sm:$0xff]
        %v783 = vld [vmem:[%s262 + $0x40] sm:$0xff]
        %v784 = vld [vmem:[%s262 + $0x48] sm:$0xff]
        %v785 = vld [vmem:[%s262 + $0x50] sm:$0xff]
        %v786 = vld [vmem:[%s262 + $0x58] sm:$0xff]
        %v787 = vld [vmem:[%s262 + $0x60] sm:$0xff]
        %v788 = vld [vmem:[%s262 + $0x68] sm:$0xff]
        %v789 = vld [vmem:[%s262 + $0x70] sm:$0xff]
        %v790 = vld [vmem:[%s262 + $0x78] sm:$0xff]
        %v791 = vld [vmem:[%s274] sm:$0xff]
        %v792 = vld [vmem:[%s274 + $0x8] sm:$0xff]
        %v793 = vld [vmem:[%s274 + $0x10] sm:$0xff]
        %v794 = vld [vmem:[%s274 + $0x18] sm:$0xff]
        %v795 = vld [vmem:[%s274 + $0x20] sm:$0xff]
        %v796 = vld [vmem:[%s274 + $0x28] sm:$0xff]
        %v797 = vld [vmem:[%s274 + $0x30] sm:$0xff]
        %v798 = vld [vmem:[%s274 + $0x38] sm:$0xff]
        %v799 = vld [vmem:[%s274 + $0x40] sm:$0xff]
        %v800 = vld [vmem:[%s274 + $0x48] sm:$0xff]
        %v801 = vld [vmem:[%s274 + $0x50] sm:$0xff]
        %v802 = vld [vmem:[%s274 + $0x58] sm:$0xff]
        %v803 = vld [vmem:[%s274 + $0x60] sm:$0xff]
        %v804 = vld [vmem:[%s274 + $0x68] sm:$0xff]
        %v805 = vld [vmem:[%s274 + $0x70] sm:$0xff]
        %v806 = vld [vmem:[%s274 + $0x78] sm:$0xff]
        %v807 = vld [vmem:[%s268] sm:$0xff]
        %v808 = vld [vmem:[%s268 + $0x8] sm:$0xff]
        %v809 = vld [vmem:[%s268 + $0x10] sm:$0xff]
        %v810 = vld [vmem:[%s268 + $0x18] sm:$0xff]
        %v811 = vld [vmem:[%s268 + $0x20] sm:$0xff]
        %v812 = vld [vmem:[%s268 + $0x28] sm:$0xff]
        %v813 = vld [vmem:[%s268 + $0x30] sm:$0xff]
        %v814 = vld [vmem:[%s268 + $0x38] sm:$0xff]
        %v815 = vld [vmem:[%s268 + $0x40] sm:$0xff]
        %v816 = vld [vmem:[%s268 + $0x48] sm:$0xff]
        %v817 = vld [vmem:[%s268 + $0x50] sm:$0xff]
        %v818 = vld [vmem:[%s268 + $0x58] sm:$0xff]
        %v819 = vld [vmem:[%s268 + $0x60] sm:$0xff]
        %v820 = vld [vmem:[%s268 + $0x68] sm:$0xff]
        %v821 = vld [vmem:[%s268 + $0x70] sm:$0xff]
        %v822 = vld [vmem:[%s268 + $0x78] sm:$0xff]
        %824 = vset.pattern.permute.xlu0 0
        %825 = vperm.xlu0 %824, %v807
        %v826 = vpop.permute.xlu0 %825
        %829 = vset.pattern.permute.xlu0 0
        %830 = vperm.xlu0 %829, %v808
        %v831 = vpop.permute.xlu0 %830
        %834 = vset.pattern.permute.xlu0 0
        %835 = vperm.xlu0 %834, %v809
        %v836 = vpop.permute.xlu0 %835
        %839 = vset.pattern.permute.xlu0 0
        %840 = vperm.xlu0 %839, %v810
        %v841 = vpop.permute.xlu0 %840
        %844 = vset.pattern.permute.xlu0 0
        %845 = vperm.xlu0 %844, %v811
        %v846 = vpop.permute.xlu0 %845
        %849 = vset.pattern.permute.xlu0 0
        %850 = vperm.xlu0 %849, %v812
        %v851 = vpop.permute.xlu0 %850
        %854 = vset.pattern.permute.xlu0 0
        %855 = vperm.xlu0 %854, %v813
        %v856 = vpop.permute.xlu0 %855
        %859 = vset.pattern.permute.xlu0 0
        %860 = vperm.xlu0 %859, %v814
        %v861 = vpop.permute.xlu0 %860
        %864 = vset.pattern.permute.xlu0 0
        %865 = vperm.xlu0 %864, %v815
        %v866 = vpop.permute.xlu0 %865
        %869 = vset.pattern.permute.xlu0 0
        %870 = vperm.xlu0 %869, %v816
        %v871 = vpop.permute.xlu0 %870
        %874 = vset.pattern.permute.xlu0 0
        %875 = vperm.xlu0 %874, %v817
        %v876 = vpop.permute.xlu0 %875
        %879 = vset.pattern.permute.xlu0 0
        %880 = vperm.xlu0 %879, %v818
        %v881 = vpop.permute.xlu0 %880
        %884 = vset.pattern.permute.xlu0 0
        %885 = vperm.xlu0 %884, %v819
        %v886 = vpop.permute.xlu0 %885
        %889 = vset.pattern.permute.xlu0 0
        %890 = vperm.xlu0 %889, %v820
        %v891 = vpop.permute.xlu0 %890
        %894 = vset.pattern.permute.xlu0 0
        %895 = vperm.xlu0 %894, %v821
        %v896 = vpop.permute.xlu0 %895
        %899 = vset.pattern.permute.xlu0 0
        %900 = vperm.xlu0 %899, %v822
        %v901 = vpop.permute.xlu0 %900
        %v903 = vmul.f32 %v791, %v826
        %v904 = vmul.f32 %v792, %v831
        %v905 = vmul.f32 %v793, %v836
        %v906 = vmul.f32 %v794, %v841
        %v907 = vmul.f32 %v795, %v846
        %v908 = vmul.f32 %v796, %v851
        %v909 = vmul.f32 %v797, %v856
        %v910 = vmul.f32 %v798, %v861
        %v911 = vmul.f32 %v799, %v866
        %v912 = vmul.f32 %v800, %v871
        %v913 = vmul.f32 %v801, %v876
        %v914 = vmul.f32 %v802, %v881
        %v915 = vmul.f32 %v803, %v886
        %v916 = vmul.f32 %v804, %v891
        %v917 = vmul.f32 %v805, %v896
        %v918 = vmul.f32 %v806, %v901
        %v919 = vadd.f32 %v775, %v903
        %v920 = vadd.f32 %v776, %v904
        %v921 = vadd.f32 %v777, %v905
        %v922 = vadd.f32 %v778, %v906
        %v923 = vadd.f32 %v779, %v907
        %v924 = vadd.f32 %v780, %v908
        %v925 = vadd.f32 %v781, %v909
        %v926 = vadd.f32 %v782, %v910
        %v927 = vadd.f32 %v783, %v911
        %v928 = vadd.f32 %v784, %v912
        %v929 = vadd.f32 %v785, %v913
        %v930 = vadd.f32 %v786, %v914
        %v931 = vadd.f32 %v787, %v915
        %v932 = vadd.f32 %v788, %v916
        %v933 = vadd.f32 %v789, %v917
        %v934 = vadd.f32 %v790, %v918
        %v935 = vmax.f32 %v919, 0.0
        %v936 = vmax.f32 %v920, 0.0
        %v937 = vmax.f32 %v921, 0.0
        %v938 = vmax.f32 %v922, 0.0
        %v939 = vmax.f32 %v923, 0.0
        %v940 = vmax.f32 %v924, 0.0
        %v941 = vmax.f32 %v925, 0.0
        %v942 = vmax.f32 %v926, 0.0
        %v943 = vmax.f32 %v927, 0.0
        %v944 = vmax.f32 %v928, 0.0
        %v945 = vmax.f32 %v929, 0.0
        %v946 = vmax.f32 %v930, 0.0
        %v947 = vmax.f32 %v931, 0.0
        %v948 = vmax.f32 %v932, 0.0
        %v949 = vmax.f32 %v933, 0.0
        %v950 = vmax.f32 %v934, 0.0
        %951 = vst [vmem:[%s274] sm:$0xff] %v935
        %952 = vst [vmem:[%s274 + $0x8] sm:$0xff] %v936
        %953 = vst [vmem:[%s274 + $0x10] sm:$0xff] %v937
        %954 = vst [vmem:[%s274 + $0x18] sm:$0xff] %v938
        %955 = vst [vmem:[%s274 + $0x20] sm:$0xff] %v939
        %956 = vst [vmem:[%s274 + $0x28] sm:$0xff] %v940
        %957 = vst [vmem:[%s274 + $0x30] sm:$0xff] %v941
        %958 = vst [vmem:[%s274 + $0x38] sm:$0xff] %v942
        %959 = vst [vmem:[%s274 + $0x40] sm:$0xff] %v943
        %960 = vst [vmem:[%s274 + $0x48] sm:$0xff] %v944
        %961 = vst [vmem:[%s274 + $0x50] sm:$0xff] %v945
        %962 = vst [vmem:[%s274 + $0x58] sm:$0xff] %v946
        %963 = vst [vmem:[%s274 + $0x60] sm:$0xff] %v947
        %964 = vst [vmem:[%s274 + $0x68] sm:$0xff] %v948
        %965 = vst [vmem:[%s274 + $0x70] sm:$0xff] %v949
        %966 = vst [vmem:[%s274 + $0x78] sm:$0xff] %v950
      $region44: #{compgcn_forward.3} parent=35 // pred_fallthru
        _
      %s967 = smul.u32 16, %s19
      %p968 = scmp.lt.s32.totalorder %s967, 47
      %s969 = scalar_select %p968, %s967, 47
      %s970 = smul.addr %s969, 8
      %s971 = scalar_lea.vmem %s4, %s970
      // Predicated region
      $region45: #{compgcn_forward.3} parent=35 // pred_check
        %p972 = pneg %p146
      $region46: #{compgcn_forward.3} parent=35 // pred_check_branch
        %974 = sbr.rel (%p972) target = $region48
      $region47: #{compgcn_forward.3} parent=35 // pred_region
        %s975 = smul.u32 16, %s19
      $region48: #{compgcn_forward.3} parent=35 // pred_fallthru
        _
    $region36: #{compgcn_forward.3} parent=5 // pred_fallthru
      _
    %p976 = scmp.le.s32.totalorder 2, %s10
    // Predicated region
    $region49: #{compgcn_forward.3} parent=5 // pred_check
      %p977 = pneg %p976
    $region50: #{compgcn_forward.3} parent=5 // pred_check_branch
      %979 = sbr.rel (%p977) target = $region52
    $region51: #{compgcn_forward.3} parent=5 // pred_region
      %s980 = ssub.s32 %s10, 2
      // Predicated region
      $region53: #{compgcn_forward.3} parent=51 // pred_check
        %p981 = pneg %p152
      $region54: #{compgcn_forward.3} parent=51 // pred_check_branch
        %983 = sbr.rel (%p981) target = $region56
      $region55: #{compgcn_forward.3} parent=51 // pred_region
        %s984 = smul.u32 16, %s21
        %p985 = scmp.lt.s32.totalorder %s984, 47
        %s986 = scalar_select %p985, %s984, 47
        %s987 = smul.addr %s986, 8
        %s988 = scalar_lea.vmem %s4, %s987
      $region56: #{compgcn_forward.3} parent=51 // pred_fallthru
        _
    $region52: #{compgcn_forward.3} parent=5 // pred_fallthru
      _
  $region6: #{compgcn_forward.3} parent=0 // loop_footer
    %s14 = sadd.s32 1, %s10
  $region7: #{compgcn_forward.3} parent=0 // loop_footer_branch
    %9 = sbr.rel target = $region3
  $region8: #{compgcn_forward.3} parent=0 // loop_exit
    _

// kernel: compgcn_forward.2
$region0: #{compgcn_forward.2}
  #allocation0 [shape = 'u32[]', space=smem, size = 0x4, offset = 0x4, fixed_abs, tag = 'smem constant byte address 0x4 - core index']
  #allocation1 [shape = 'u32[144,128]{1,0:T(1,128)}', space=vmem, size = 0x12000, scoped, tag = 'internal scratch']
  %s0 = inlined_call_operand.vmem [shape: f32[384,32], index: 0, kind: input, shape index: {}]
  %s1 = inlined_call_operand.vmem [shape: f32[384,1], index: 1, kind: input, shape index: {}]
  %s2 = inlined_call_operand.vmem [shape: f32[32,256], index: 2, kind: input, shape index: {}]
  %s3 = inlined_call_operand.vmem [shape: f32[384,128], index: 3, kind: input, shape index: {}]
  %s4 = inlined_call_operand.vmem [shape: f32[1,128], index: 4, kind: input, shape index: {}]
  %s5 = inlined_call_operand.vmem [shape: f32[384,128], index: 5, kind: output, shape index: {0}]
  %s6 = inlined_call_operand.vmem [shape: bf16[384,128], index: 6, kind: output, shape index: {1}]
  %7 = xla_tuple %s5, %s6
  %s8 = sld [smem:[#allocation0]]
  $region38: #{compgcn_forward.2} parent=0
    _
  %s10 = ssub.s32 1, %s8
  %s11 = scalar_select 0, %s10, %s8
  // Predicated region
  $region2: #{compgcn_forward.2} parent=0 // pred_check
    _
  $region3: #{compgcn_forward.2} parent=0 // pred_check_branch
    %13 = sbr.rel (0) target = $region5
  $region4: #{compgcn_forward.2} parent=0 // pred_region
    _
  $region5: #{compgcn_forward.2} parent=0 // pred_fallthru
    _
  // Predicated region
  $region6: #{compgcn_forward.2} parent=0 // pred_check
    _
  $region7: #{compgcn_forward.2} parent=0 // pred_check_branch
    %15 = sbr.rel (0) target = $region9
  $region8: #{compgcn_forward.2} parent=0 // pred_region
    _
  $region9: #{compgcn_forward.2} parent=0 // pred_fallthru
    _
  // Predicated region
  $region10: #{compgcn_forward.2} parent=0 // pred_check
    _
  $region11: #{compgcn_forward.2} parent=0 // pred_check_branch
    %17 = sbr.rel (0) target = $region13
  $region12: #{compgcn_forward.2} parent=0 // pred_region
    _
  $region13: #{compgcn_forward.2} parent=0 // pred_fallthru
    _
  // Predicated region
  $region14: #{compgcn_forward.2} parent=0 // pred_check
    _
  $region15: #{compgcn_forward.2} parent=0 // pred_check_branch
    %19 = sbr.rel (0) target = $region17
  $region16: #{compgcn_forward.2} parent=0 // pred_region
    _
  $region17: #{compgcn_forward.2} parent=0 // pred_fallthru
    _
  // Predicated region
  $region18: #{compgcn_forward.2} parent=0 // pred_check
    _
  $region19: #{compgcn_forward.2} parent=0 // pred_check_branch
    %21 = sbr.rel (0) target = $region21
  $region20: #{compgcn_forward.2} parent=0 // pred_region
    _
  $region21: #{compgcn_forward.2} parent=0 // pred_fallthru
    _
  %v22 = vld [vmem:[%s0] sm:$0xff]
  %v23 = vld [vmem:[%s0 + $0x8] sm:$0xff]
  %v24 = vld [vmem:[%s0 + $0x10] sm:$0xff]
  %v25 = vld [vmem:[%s0 + $0x18] sm:$0xff]
  %v26 = vld [vmem:[%s0 + $0x20] sm:$0xff]
  %v27 = vld [vmem:[%s0 + $0x28] sm:$0xff]
  %v28 = vld [vmem:[%s0 + $0x30] sm:$0xff]
  %v29 = vld [vmem:[%s0 + $0x38] sm:$0xff]
  %v30 = vld [vmem:[%s0 + $0x40] sm:$0xff]
  %v31 = vld [vmem:[%s0 + $0x48] sm:$0xff]
  %v32 = vld [vmem:[%s0 + $0x50] sm:$0xff]
  %v33 = vld [vmem:[%s0 + $0x58] sm:$0xff]
  %v34 = vld [vmem:[%s0 + $0x60] sm:$0xff]
  %v35 = vld [vmem:[%s0 + $0x68] sm:$0xff]
  %v36 = vld [vmem:[%s0 + $0x70] sm:$0xff]
  %v37 = vld [vmem:[%s0 + $0x78] sm:$0xff]
  %v38 = vld [vmem:[%s0 + $0x80] sm:$0xff]
  %v39 = vld [vmem:[%s0 + $0x88] sm:$0xff]
  %v40 = vld [vmem:[%s0 + $0x90] sm:$0xff]
  %v41 = vld [vmem:[%s0 + $0x98] sm:$0xff]
  %v42 = vld [vmem:[%s0 + $0xa0] sm:$0xff]
  %v43 = vld [vmem:[%s0 + $0xa8] sm:$0xff]
  %v44 = vld [vmem:[%s0 + $0xb0] sm:$0xff]
  %v45 = vld [vmem:[%s0 + $0xb8] sm:$0xff]
  %v46 = vld [vmem:[%s0 + $0xc0] sm:$0xff]
  %v47 = vld [vmem:[%s0 + $0xc8] sm:$0xff]
  %v48 = vld [vmem:[%s0 + $0xd0] sm:$0xff]
  %v49 = vld [vmem:[%s0 + $0xd8] sm:$0xff]
  %v50 = vld [vmem:[%s0 + $0xe0] sm:$0xff]
  %v51 = vld [vmem:[%s0 + $0xe8] sm:$0xff]
  %v52 = vld [vmem:[%s0 + $0xf0] sm:$0xff]
  %v53 = vld [vmem:[%s0 + $0xf8] sm:$0xff]
  %v54 = vld [vmem:[%s0 + $0x100] sm:$0xff]
  %v55 = vld [vmem:[%s0 + $0x108] sm:$0xff]
  %v56 = vld [vmem:[%s0 + $0x110] sm:$0xff]
  %v57 = vld [vmem:[%s0 + $0x118] sm:$0xff]
  %v58 = vld [vmem:[%s0 + $0x120] sm:$0xff]
  %v59 = vld [vmem:[%s0 + $0x128] sm:$0xff]
  %v60 = vld [vmem:[%s0 + $0x130] sm:$0xff]
  %v61 = vld [vmem:[%s0 + $0x138] sm:$0xff]
  %v62 = vld [vmem:[%s0 + $0x140] sm:$0xff]
  %v63 = vld [vmem:[%s0 + $0x148] sm:$0xff]
  %v64 = vld [vmem:[%s0 + $0x150] sm:$0xff]
  %v65 = vld [vmem:[%s0 + $0x158] sm:$0xff]
  %v66 = vld [vmem:[%s0 + $0x160] sm:$0xff]
  %v67 = vld [vmem:[%s0 + $0x168] sm:$0xff]
  %v68 = vld [vmem:[%s0 + $0x170] sm:$0xff]
  %v69 = vld [vmem:[%s0 + $0x178] sm:$0xff]
  %v70 = vld [vmem:[%s1] sm:$0xff]
  %v71 = vld [vmem:[%s1 + $0x8] sm:$0xff]
  %v72 = vld [vmem:[%s1 + $0x10] sm:$0xff]
  %v73 = vld [vmem:[%s1 + $0x18] sm:$0xff]
  %v74 = vld [vmem:[%s1 + $0x20] sm:$0xff]
  %v75 = vld [vmem:[%s1 + $0x28] sm:$0xff]
  %v76 = vld [vmem:[%s1 + $0x30] sm:$0xff]
  %v77 = vld [vmem:[%s1 + $0x38] sm:$0xff]
  %v78 = vld [vmem:[%s1 + $0x40] sm:$0xff]
  %v79 = vld [vmem:[%s1 + $0x48] sm:$0xff]
  %v80 = vld [vmem:[%s1 + $0x50] sm:$0xff]
  %v81 = vld [vmem:[%s1 + $0x58] sm:$0xff]
  %v82 = vld [vmem:[%s1 + $0x60] sm:$0xff]
  %v83 = vld [vmem:[%s1 + $0x68] sm:$0xff]
  %v84 = vld [vmem:[%s1 + $0x70] sm:$0xff]
  %v85 = vld [vmem:[%s1 + $0x78] sm:$0xff]
  %v86 = vld [vmem:[%s1 + $0x80] sm:$0xff]
  %v87 = vld [vmem:[%s1 + $0x88] sm:$0xff]
  %v88 = vld [vmem:[%s1 + $0x90] sm:$0xff]
  %v89 = vld [vmem:[%s1 + $0x98] sm:$0xff]
  %v90 = vld [vmem:[%s1 + $0xa0] sm:$0xff]
  %v91 = vld [vmem:[%s1 + $0xa8] sm:$0xff]
  %v92 = vld [vmem:[%s1 + $0xb0] sm:$0xff]
  %v93 = vld [vmem:[%s1 + $0xb8] sm:$0xff]
  %v94 = vld [vmem:[%s1 + $0xc0] sm:$0xff]
  %v95 = vld [vmem:[%s1 + $0xc8] sm:$0xff]
  %v96 = vld [vmem:[%s1 + $0xd0] sm:$0xff]
  %v97 = vld [vmem:[%s1 + $0xd8] sm:$0xff]
  %v98 = vld [vmem:[%s1 + $0xe0] sm:$0xff]
  %v99 = vld [vmem:[%s1 + $0xe8] sm:$0xff]
  %v100 = vld [vmem:[%s1 + $0xf0] sm:$0xff]
  %v101 = vld [vmem:[%s1 + $0xf8] sm:$0xff]
  %v102 = vld [vmem:[%s1 + $0x100] sm:$0xff]
  %v103 = vld [vmem:[%s1 + $0x108] sm:$0xff]
  %v104 = vld [vmem:[%s1 + $0x110] sm:$0xff]
  %v105 = vld [vmem:[%s1 + $0x118] sm:$0xff]
  %v106 = vld [vmem:[%s1 + $0x120] sm:$0xff]
  %v107 = vld [vmem:[%s1 + $0x128] sm:$0xff]
  %v108 = vld [vmem:[%s1 + $0x130] sm:$0xff]
  %v109 = vld [vmem:[%s1 + $0x138] sm:$0xff]
  %v110 = vld [vmem:[%s1 + $0x140] sm:$0xff]
  %v111 = vld [vmem:[%s1 + $0x148] sm:$0xff]
  %v112 = vld [vmem:[%s1 + $0x150] sm:$0xff]
  %v113 = vld [vmem:[%s1 + $0x158] sm:$0xff]
  %v114 = vld [vmem:[%s1 + $0x160] sm:$0xff]
  %v115 = vld [vmem:[%s1 + $0x168] sm:$0xff]
  %v116 = vld [vmem:[%s1 + $0x170] sm:$0xff]
  %v117 = vld [vmem:[%s1 + $0x178] sm:$0xff]
  %119 = vset.pattern.permute.xlu0 0
  %120 = vperm.xlu0 %119, %v70
  %v121 = vpop.permute.xlu0 %120
  %124 = vset.pattern.permute.xlu0 0
  %125 = vperm.xlu0 %124, %v71
  %v126 = vpop.permute.xlu0 %125
  %129 = vset.pattern.permute.xlu0 0
  %130 = vperm.xlu0 %129, %v72
  %v131 = vpop.permute.xlu0 %130
  %134 = vset.pattern.permute.xlu0 0
  %135 = vperm.xlu0 %134, %v73
  %v136 = vpop.permute.xlu0 %135
  %139 = vset.pattern.permute.xlu0 0
  %140 = vperm.xlu0 %139, %v74
  %v141 = vpop.permute.xlu0 %140
  %144 = vset.pattern.permute.xlu0 0
  %145 = vperm.xlu0 %144, %v75
  %v146 = vpop.permute.xlu0 %145
  %149 = vset.pattern.permute.xlu0 0
  %150 = vperm.xlu0 %149, %v76
  %v151 = vpop.permute.xlu0 %150
  %154 = vset.pattern.permute.xlu0 0
  %155 = vperm.xlu0 %154, %v77
  %v156 = vpop.permute.xlu0 %155
  %159 = vset.pattern.permute.xlu0 0
  %160 = vperm.xlu0 %159, %v78
  %v161 = vpop.permute.xlu0 %160
  %164 = vset.pattern.permute.xlu0 0
  %165 = vperm.xlu0 %164, %v79
  %v166 = vpop.permute.xlu0 %165
  %169 = vset.pattern.permute.xlu0 0
  %170 = vperm.xlu0 %169, %v80
  %v171 = vpop.permute.xlu0 %170
  %174 = vset.pattern.permute.xlu0 0
  %175 = vperm.xlu0 %174, %v81
  %v176 = vpop.permute.xlu0 %175
  %179 = vset.pattern.permute.xlu0 0
  %180 = vperm.xlu0 %179, %v82
  %v181 = vpop.permute.xlu0 %180
  %184 = vset.pattern.permute.xlu0 0
  %185 = vperm.xlu0 %184, %v83
  %v186 = vpop.permute.xlu0 %185
  %189 = vset.pattern.permute.xlu0 0
  %190 = vperm.xlu0 %189, %v84
  %v191 = vpop.permute.xlu0 %190
  %194 = vset.pattern.permute.xlu0 0
  %195 = vperm.xlu0 %194, %v85
  %v196 = vpop.permute.xlu0 %195
  %199 = vset.pattern.permute.xlu0 0
  %200 = vperm.xlu0 %199, %v86
  %v201 = vpop.permute.xlu0 %200
  %204 = vset.pattern.permute.xlu0 0
  %205 = vperm.xlu0 %204, %v87
  %v206 = vpop.permute.xlu0 %205
  %209 = vset.pattern.permute.xlu0 0
  %210 = vperm.xlu0 %209, %v88
  %v211 = vpop.permute.xlu0 %210
  %214 = vset.pattern.permute.xlu0 0
  %215 = vperm.xlu0 %214, %v89
  %v216 = vpop.permute.xlu0 %215
  %219 = vset.pattern.permute.xlu0 0
  %220 = vperm.xlu0 %219, %v90
  %v221 = vpop.permute.xlu0 %220
  %224 = vset.pattern.permute.xlu0 0
  %225 = vperm.xlu0 %224, %v91
  %v226 = vpop.permute.xlu0 %225
  %229 = vset.pattern.permute.xlu0 0
  %230 = vperm.xlu0 %229, %v92
  %v231 = vpop.permute.xlu0 %230
  %234 = vset.pattern.permute.xlu0 0
  %235 = vperm.xlu0 %234, %v93
  %v236 = vpop.permute.xlu0 %235
  %239 = vset.pattern.permute.xlu0 0
  %240 = vperm.xlu0 %239, %v94
  %v241 = vpop.permute.xlu0 %240
  %244 = vset.pattern.permute.xlu0 0
  %245 = vperm.xlu0 %244, %v95
  %v246 = vpop.permute.xlu0 %245
  %249 = vset.pattern.permute.xlu0 0
  %250 = vperm.xlu0 %249, %v96
  %v251 = vpop.permute.xlu0 %250
  %254 = vset.pattern.permute.xlu0 0
  %255 = vperm.xlu0 %254, %v97
  %v256 = vpop.permute.xlu0 %255
  %259 = vset.pattern.permute.xlu0 0
  %260 = vperm.xlu0 %259, %v98
  %v261 = vpop.permute.xlu0 %260
  %264 = vset.pattern.permute.xlu0 0
  %265 = vperm.xlu0 %264, %v99
  %v266 = vpop.permute.xlu0 %265
  %269 = vset.pattern.permute.xlu0 0
  %270 = vperm.xlu0 %269, %v100
  %v271 = vpop.permute.xlu0 %270
  %274 = vset.pattern.permute.xlu0 0
  %275 = vperm.xlu0 %274, %v101
  %v276 = vpop.permute.xlu0 %275
  %279 = vset.pattern.permute.xlu0 0
  %280 = vperm.xlu0 %279, %v102
  %v281 = vpop.permute.xlu0 %280
  %284 = vset.pattern.permute.xlu0 0
  %285 = vperm.xlu0 %284, %v103
  %v286 = vpop.permute.xlu0 %285
  %289 = vset.pattern.permute.xlu0 0
  %290 = vperm.xlu0 %289, %v104
  %v291 = vpop.permute.xlu0 %290
  %294 = vset.pattern.permute.xlu0 0
  %295 = vperm.xlu0 %294, %v105
  %v296 = vpop.permute.xlu0 %295
  %299 = vset.pattern.permute.xlu0 0
  %300 = vperm.xlu0 %299, %v106
  %v301 = vpop.permute.xlu0 %300
  %304 = vset.pattern.permute.xlu0 0
  %305 = vperm.xlu0 %304, %v107
  %v306 = vpop.permute.xlu0 %305
  %309 = vset.pattern.permute.xlu0 0
  %310 = vperm.xlu0 %309, %v108
  %v311 = vpop.permute.xlu0 %310
  %314 = vset.pattern.permute.xlu0 0
  %315 = vperm.xlu0 %314, %v109
  %v316 = vpop.permute.xlu0 %315
  %319 = vset.pattern.permute.xlu0 0
  %320 = vperm.xlu0 %319, %v110
  %v321 = vpop.permute.xlu0 %320
  %324 = vset.pattern.permute.xlu0 0
  %325 = vperm.xlu0 %324, %v111
  %v326 = vpop.permute.xlu0 %325
  %329 = vset.pattern.permute.xlu0 0
  %330 = vperm.xlu0 %329, %v112
  %v331 = vpop.permute.xlu0 %330
  %334 = vset.pattern.permute.xlu0 0
  %335 = vperm.xlu0 %334, %v113
  %v336 = vpop.permute.xlu0 %335
  %339 = vset.pattern.permute.xlu0 0
  %340 = vperm.xlu0 %339, %v114
  %v341 = vpop.permute.xlu0 %340
  %344 = vset.pattern.permute.xlu0 0
  %345 = vperm.xlu0 %344, %v115
  %v346 = vpop.permute.xlu0 %345
  %349 = vset.pattern.permute.xlu0 0
  %350 = vperm.xlu0 %349, %v116
  %v351 = vpop.permute.xlu0 %350
  %354 = vset.pattern.permute.xlu0 0
  %355 = vperm.xlu0 %354, %v117
  %v356 = vpop.permute.xlu0 %355
  %v358 = vmul.f32 %v22, %v121
  %v359 = vmul.f32 %v23, %v126
  %v360 = vmul.f32 %v24, %v131
  %v361 = vmul.f32 %v25, %v136
  %v362 = vmul.f32 %v26, %v141
  %v363 = vmul.f32 %v27, %v146
  %v364 = vmul.f32 %v28, %v151
  %v365 = vmul.f32 %v29, %v156
  %v366 = vmul.f32 %v30, %v161
  %v367 = vmul.f32 %v31, %v166
  %v368 = vmul.f32 %v32, %v171
  %v369 = vmul.f32 %v33, %v176
  %v370 = vmul.f32 %v34, %v181
  %v371 = vmul.f32 %v35, %v186
  %v372 = vmul.f32 %v36, %v191
  %v373 = vmul.f32 %v37, %v196
  %v374 = vmul.f32 %v38, %v201
  %v375 = vmul.f32 %v39, %v206
  %v376 = vmul.f32 %v40, %v211
  %v377 = vmul.f32 %v41, %v216
  %v378 = vmul.f32 %v42, %v221
  %v379 = vmul.f32 %v43, %v226
  %v380 = vmul.f32 %v44, %v231
  %v381 = vmul.f32 %v45, %v236
  %v382 = vmul.f32 %v46, %v241
  %v383 = vmul.f32 %v47, %v246
  %v384 = vmul.f32 %v48, %v251
  %v385 = vmul.f32 %v49, %v256
  %v386 = vmul.f32 %v50, %v261
  %v387 = vmul.f32 %v51, %v266
  %v388 = vmul.f32 %v52, %v271
  %v389 = vmul.f32 %v53, %v276
  %v390 = vmul.f32 %v54, %v281
  %v391 = vmul.f32 %v55, %v286
  %v392 = vmul.f32 %v56, %v291
  %v393 = vmul.f32 %v57, %v296
  %v394 = vmul.f32 %v58, %v301
  %v395 = vmul.f32 %v59, %v306
  %v396 = vmul.f32 %v60, %v311
  %v397 = vmul.f32 %v61, %v316
  %v398 = vmul.f32 %v62, %v321
  %v399 = vmul.f32 %v63, %v326
  %v400 = vmul.f32 %v64, %v331
  %v401 = vmul.f32 %v65, %v336
  %v402 = vmul.f32 %v66, %v341
  %v403 = vmul.f32 %v67, %v346
  %v404 = vmul.f32 %v68, %v351
  %v405 = vmul.f32 %v69, %v356
  %v406 = vld [vmem:[%s2] sm:$0xff]
  %v407 = vld [vmem:[%s2 + $0x8] sm:$0xff]
  %v408 = vld [vmem:[%s2 + $0x10] sm:$0xff]
  %v409 = vld [vmem:[%s2 + $0x18] sm:$0xff]
  %v410 = vld [vmem:[%s2 + $0x20] sm:$0xff]
  %v411 = vld [vmem:[%s2 + $0x28] sm:$0xff]
  %v412 = vld [vmem:[%s2 + $0x30] sm:$0xff]
  %v413 = vld [vmem:[%s2 + $0x38] sm:$0xff]
  %vm414 = vcmask 261120
  %v416 = vsel %vm414, %v358, 0
  %v419 = vsel %vm414, %v359, 0
  %v422 = vsel %vm414, %v360, 0
  %v425 = vsel %vm414, %v361, 0
  %v428 = vsel %vm414, %v362, 0
  %v431 = vsel %vm414, %v363, 0
  %v434 = vsel %vm414, %v364, 0
  %v437 = vsel %vm414, %v365, 0
  %v440 = vsel %vm414, %v366, 0
  %v443 = vsel %vm414, %v367, 0
  %v446 = vsel %vm414, %v368, 0
  %v449 = vsel %vm414, %v369, 0
  %v452 = vsel %vm414, %v370, 0
  %v455 = vsel %vm414, %v371, 0
  %v458 = vsel %vm414, %v372, 0
  %v461 = vsel %vm414, %v373, 0
  %v464 = vsel %vm414, %v374, 0
  %v467 = vsel %vm414, %v375, 0
  %v470 = vsel %vm414, %v376, 0
  %v473 = vsel %vm414, %v377, 0
  %v476 = vsel %vm414, %v378, 0
  %v479 = vsel %vm414, %v379, 0
  %v482 = vsel %vm414, %v380, 0
  %v485 = vsel %vm414, %v381, 0
  %v488 = vsel %vm414, %v382, 0
  %v491 = vsel %vm414, %v383, 0
  %v494 = vsel %vm414, %v384, 0
  %v497 = vsel %vm414, %v385, 0
  %v500 = vsel %vm414, %v386, 0
  %v503 = vsel %vm414, %v387, 0
  %v506 = vsel %vm414, %v388, 0
  %v509 = vsel %vm414, %v389, 0
  %v512 = vsel %vm414, %v390, 0
  %v515 = vsel %vm414, %v391, 0
  %v518 = vsel %vm414, %v392, 0
  %v521 = vsel %vm414, %v393, 0
  %v524 = vsel %vm414, %v394, 0
  %v527 = vsel %vm414, %v395, 0
  %v530 = vsel %vm414, %v396, 0
  %v533 = vsel %vm414, %v397, 0
  %v536 = vsel %vm414, %v398, 0
  %v539 = vsel %vm414, %v399, 0
  %v542 = vsel %vm414, %v400, 0
  %v545 = vsel %vm414, %v401, 0
  %v548 = vsel %vm414, %v402, 0
  %v551 = vsel %vm414, %v403, 0
  %v554 = vsel %vm414, %v404, 0
  %v557 = vsel %vm414, %v405, 0
  %559 = vmatprep.subr.mxu0 %v407
  %560 = vmatpush1.msra.mxu0 %v406
  %561 = vmatprep.subr.mxu0 %v409
  %562 = vmatpush1.msra.mxu0 %v408
  %563 = vmatprep.subr.mxu0 %v411
  %564 = vmatpush1.msra.mxu0 %v410
  %565 = vmatprep.subr.mxu0 %v413
  %566 = vmatpush1.msra.mxu0 %v412
  %567 = vmatprep.subr.mxu0 0.0
  %568 = vmatpush1.msra.mxu0 0.0
  %569 = vmatprep.subr.mxu0 0.0
  %570 = vmatpush1.msra.mxu0 0.0
  %571 = vmatprep.subr.mxu0 0.0
  %572 = vmatpush1.msra.mxu0 0.0
  %573 = vmatprep.subr.mxu0 0.0
  %574 = vmatpush1.msra.mxu0 0.0
  %575 = vmatprep.subr.mxu0 0.0
  %576 = vmatpush1.msra.mxu0 0.0
  %577 = vmatprep.subr.mxu0 0.0
  %578 = vmatpush1.msra.mxu0 0.0
  %579 = vmatprep.subr.mxu0 0.0
  %580 = vmatpush1.msra.mxu0 0.0
  %581 = vmatprep.subr.mxu0 0.0
  %582 = vmatpush1.msra.mxu0 0.0
  %583 = vmatprep.subr.mxu0 0.0
  %584 = vmatpush1.msra.mxu0 0.0
  %585 = vmatprep.subr.mxu0 0.0
  %586 = vmatpush1.msra.mxu0 0.0
  %587 = vmatprep.subr.mxu0 0.0
  %588 = vmatpush1.msra.mxu0 0.0
  %589 = vmatprep.subr.mxu0 0.0
  %590 = vmatpush1.msra.mxu0 0.0
  %591 = vmatprep.subr.mxu0 0.0
  %592 = vmatpush1.msra.mxu0 0.0
  %593 = vmatprep.subr.mxu0 0.0
  %594 = vmatpush1.msra.mxu0 0.0
  %595 = vmatprep.subr.mxu0 0.0
  %596 = vmatpush1.msra.mxu0 0.0
  %597 = vmatprep.subr.mxu0 0.0
  %598 = vmatpush1.msra.mxu0 0.0
  %599 = vmatprep.subr.mxu0 0.0
  %600 = vmatpush1.msra.mxu0 0.0
  %601 = vmatprep.subr.mxu0 0.0
  %602 = vmatpush1.msra.mxu0 0.0
  %603 = vmatprep.subr.mxu0 0.0
  %604 = vmatpush1.msra.mxu0 0.0
  %605 = vmatprep.subr.mxu0 0.0
  %606 = vmatpush1.msra.mxu0 0.0
  %607 = vmatprep.subr.mxu0 0.0
  %608 = vmatpush1.msra.mxu0 0.0
  %609 = vmatprep.subr.mxu0 0.0
  %610 = vmatpush1.msra.mxu0 0.0
  %611 = vmatprep.subr.mxu0 0.0
  %612 = vmatpush1.msra.mxu0 0.0
  %613 = vmatprep.subr.mxu0 0.0
  %614 = vmatpush1.msra.mxu0 0.0
  %615 = vmatprep.subr.mxu0 0.0
  %616 = vmatpush1.msra.mxu0 0.0
  %617 = vmatprep.subr.mxu0 0.0
  %618 = vmatpush1.msra.mxu0 0.0
  %619 = vmatprep.subr.mxu0 0.0
  %620 = vmatpush1.msra.mxu0 0.0
  %621 = vmatprep.subr.mxu0 0.0
  %622 = vmatpush1.msra.mxu0 0.0
  %623 = vmatprep.mubr.f32.mxu0 0.0
  %624 = vmatmul.mubr.f32.gmra.mrb[0].mxu0 %v416
  %v625 = vpop.f32.mrb[0].mxu0
  %v626 = vadd.f32 0.0, %v625
  %v627 = vpop.f32.mrb[0].mxu0
  %v628 = vadd.f32 0.0, %v627
  %629 = vmatprep.mubr.f32.mxu0 0.0
  %630 = vmatmul.mubr.f32.gmra.mrb[0].mxu0 %v419
  %v631 = vpop.f32.mrb[0].mxu0
  %v632 = vadd.f32 0.0, %v631
  %v633 = vpop.f32.mrb[0].mxu0
  %v634 = vadd.f32 0.0, %v633
  %635 = vmatprep.mubr.f32.mxu0 0.0
  %636 = vmatmul.mubr.f32.gmra.mrb[0].mxu0 %v422
  %v637 = vpop.f32.mrb[0].mxu0
  %v638 = vadd.f32 0.0, %v637
  %v639 = vpop.f32.mrb[0].mxu0
  %v640 = vadd.f32 0.0, %v639
  %641 = vmatprep.mubr.f32.mxu0 0.0
  %642 = vmatmul.mubr.f32.gmra.mrb[0].mxu0 %v425
  %v643 = vpop.f32.mrb[0].mxu0
  %v644 = vadd.f32 0.0, %v643
  %v645 = vpop.f32.mrb[0].mxu0
  %v646 = vadd.f32 0.0, %v645
  %647 = vmatprep.mubr.f32.mxu0 0.0
  %648 = vmatmul.mubr.f32.gmra.mrb[0].mxu0 %v428
  %v649 = vpop.f32.mrb[0].mxu0
  %v650 = vadd.f32 0.0, %v649
  %v651 = vpop.f32.mrb[0].mxu0
  %v652 = vadd.f32 0.0, %v651
  %653 = vmatprep.mubr.f32.mxu0 0.0
  %654 = vmatmul.mubr.f32.gmra.mrb[0].mxu0 %v431
  %v655 = vpop.f32.mrb[0].mxu0
  %v656 = vadd.f32 0.0, %v655
  %v657 = vpop.f32.mrb[0].mxu0
  %v658 = vadd.f32 0.0, %v657
  %659 = vmatprep.mubr.f32.mxu0 0.0
  %660 = vmatmul.mubr.f32.gmra.mrb[0].mxu0 %v434
  %v661 = vpop.f32.mrb[0].mxu0
  %v662 = vadd.f32 0.0, %v661
  %v663 = vpop.f32.mrb[0].mxu0
  %v664 = vadd.f32 0.0, %v663
  %665 = vmatprep.mubr.f32.mxu0 0.0
  %666 = vmatmul.mubr.f32.gmra.mrb[0].mxu0 %v437
  %v667 = vpop.f32.mrb[0].mxu0
  %v668 = vadd.f32 0.0, %v667
  %v669 = vpop.f32.mrb[0].mxu0
  %v670 = vadd.f32 0.0, %v669
  %671 = vmatprep.mubr.f32.mxu0 0.0
  %672 = vmatmul.mubr.f32.gmra.mrb[0].mxu0 %v440
  %v673 = vpop.f32.mrb[0].mxu0
  %v674 = vadd.f32 0.0, %v673
  %v675 = vpop.f32.mrb[0].mxu0
  %v676 = vadd.f32 0.0, %v675
  %677 = vmatprep.mubr.f32.mxu0 0.0
  %678 = vmatmul.mubr.f32.gmra.mrb[0].mxu0 %v443
  %v679 = vpop.f32.mrb[0].mxu0
  %v680 = vadd.f32 0.0, %v679
  %v681 = vpop.f32.mrb[0].mxu0
  %v682 = vadd.f32 0.0, %v681
  %683 = vmatprep.mubr.f32.mxu0 0.0
  %684 = vmatmul.mubr.f32.gmra.mrb[0].mxu0 %v446
  %v685 = vpop.f32.mrb[0].mxu0
  %v686 = vadd.f32 0.0, %v685
  %v687 = vpop.f32.mrb[0].mxu0
  %v688 = vadd.f32 0.0, %v687
  %689 = vmatprep.mubr.f32.mxu0 0.0
  %690 = vmatmul.mubr.f32.gmra.mrb[0].mxu0 %v449
  %v691 = vpop.f32.mrb[0].mxu0
  %v692 = vadd.f32 0.0, %v691
  %v693 = vpop.f32.mrb[0].mxu0
  %v694 = vadd.f32 0.0, %v693
  %695 = vmatprep.mubr.f32.mxu0 0.0
  %696 = vmatmul.mubr.f32.gmra.mrb[0].mxu0 %v452
  %v697 = vpop.f32.mrb[0].mxu0
  %v698 = vadd.f32 0.0, %v697
  %v699 = vpop.f32.mrb[0].mxu0
  %v700 = vadd.f32 0.0, %v699
  %701 = vmatprep.mubr.f32.mxu0 0.0
  %702 = vmatmul.mubr.f32.gmra.mrb[0].mxu0 %v455
  %v703 = vpop.f32.mrb[0].mxu0
  %v704 = vadd.f32 0.0, %v703
  %v705 = vpop.f32.mrb[0].mxu0
  %v706 = vadd.f32 0.0, %v705
  %707 = vmatprep.mubr.f32.mxu0 0.0
  %708 = vmatmul.mubr.f32.gmra.mrb[0].mxu0 %v458
  %v709 = vpop.f32.mrb[0].mxu0
  %v710 = vadd.f32 0.0, %v709
  %v711 = vpop.f32.mrb[0].mxu0
  %v712 = vadd.f32 0.0, %v711
  %713 = vmatprep.mubr.f32.mxu0 0.0
  %714 = vmatmul.mubr.f32.gmra.mrb[0].mxu0 %v461
  %v715 = vpop.f32.mrb[0].mxu0
  %v716 = vadd.f32 0.0, %v715
  %v717 = vpop.f32.mrb[0].mxu0
  %v718 = vadd.f32 0.0, %v717
  %719 = vmatprep.mubr.f32.mxu0 0.0
  %720 = vmatmul.mubr.f32.gmra.mrb[0].mxu0 %v464
  %v721 = vpop.f32.mrb[0].mxu0
  %v722 = vadd.f32 0.0, %v721
  %v723 = vpop.f32.mrb[0].mxu0
  %v724 = vadd.f32 0.0, %v723
  %725 = vmatprep.mubr.f32.mxu0 0.0
  %726 = vmatmul.mubr.f32.gmra.mrb[0].mxu0 %v467
  %v727 = vpop.f32.mrb[0].mxu0
  %v728 = vadd.f32 0.0, %v727
  %v729 = vpop.f32.mrb[0].mxu0
  %v730 = vadd.f32 0.0, %v729
  %731 = vmatprep.mubr.f32.mxu0 0.0
  %732 = vmatmul.mubr.f32.gmra.mrb[0].mxu0 %v470
  %v733 = vpop.f32.mrb[0].mxu0
  %v734 = vadd.f32 0.0, %v733
  %v735 = vpop.f32.mrb[0].mxu0
  %v736 = vadd.f32 0.0, %v735
  %737 = vmatprep.mubr.f32.mxu0 0.0
  %738 = vmatmul.mubr.f32.gmra.mrb[0].mxu0 %v473
  %v739 = vpop.f32.mrb[0].mxu0
  %v740 = vadd.f32 0.0, %v739
  %v741 = vpop.f32.mrb[0].mxu0
  %v742 = vadd.f32 0.0, %v741
  %743 = vmatprep.mubr.f32.mxu0 0.0
  %744 = vmatmul.mubr.f32.gmra.mrb[0].mxu0 %v476
  %v745 = vpop.f32.mrb[0].mxu0
  %v746 = vadd.f32 0.0, %v745
  %v747 = vpop.f32.mrb[0].mxu0
  %v748 = vadd.f32 0.0, %v747
  %749 = vmatprep.mubr.f32.mxu0 0.0
  %750 = vmatmul.mubr.f32.gmra.mrb[0].mxu0 %v479
  %v751 = vpop.f32.mrb[0].mxu0
  %v752 = vadd.f32 0.0, %v751
  %v753 = vpop.f32.mrb[0].mxu0
  %v754 = vadd.f32 0.0, %v753
  %755 = vmatprep.mubr.f32.mxu0 0.0
  %756 = vmatmul.mubr.f32.gmra.mrb[0].mxu0 %v482
  %v757 = vpop.f32.mrb[0].mxu0
  %v758 = vadd.f32 0.0, %v757
  %v759 = vpop.f32.mrb[0].mxu0
  %v760 = vadd.f32 0.0, %v759
  %761 = vmatprep.mubr.f32.mxu0 0.0
  %762 = vmatmul.mubr.f32.gmra.mrb[0].mxu0 %v485
  %v763 = vpop.f32.mrb[0].mxu0
  %v764 = vadd.f32 0.0, %v763
  %v765 = vpop.f32.mrb[0].mxu0
  %v766 = vadd.f32 0.0, %v765
  %767 = vmatprep.mubr.f32.mxu0 0.0
  %768 = vmatmul.mubr.f32.gmra.mrb[0].mxu0 %v488
  %v769 = vpop.f32.mrb[0].mxu0
  %v770 = vadd.f32 0.0, %v769
  %v771 = vpop.f32.mrb[0].mxu0
  %v772 = vadd.f32 0.0, %v771
  %773 = vmatprep.mubr.f32.mxu0 0.0
  %774 = vmatmul.mubr.f32.gmra.mrb[0].mxu0 %v491
  %v775 = vpop.f32.mrb[0].mxu0
  %v776 = vadd.f32 0.0, %v775
  %v777 = vpop.f32.mrb[0].mxu0
  %v778 = vadd.f32 0.0, %v777
  %779 = vmatprep.mubr.f32.mxu0 0.0
  %780 = vmatmul.mubr.f32.gmra.mrb[0].mxu0 %v494
  %v781 = vpop.f32.mrb[0].mxu0
  %v782 = vadd.f32 0.0, %v781
  %v783 = vpop.f32.mrb[0].mxu0
  %v784 = vadd.f32 0.0, %v783
  %785 = vmatprep.mubr.f32.mxu0 0.0
  %786 = vmatmul.mubr.f32.gmra.mrb[0].mxu0 %v497
  %v787 = vpop.f32.mrb[0].mxu0
  %v788 = vadd.f32 0.0, %v787
  %v789 = vpop.f32.mrb[0].mxu0
  %v790 = vadd.f32 0.0, %v789
  %791 = vmatprep.mubr.f32.mxu0 0.0
  %792 = vmatmul.mubr.f32.gmra.mrb[0].mxu0 %v500
  %v793 = vpop.f32.mrb[0].mxu0
  %v794 = vadd.f32 0.0, %v793
  %v795 = vpop.f32.mrb[0].mxu0
  %v796 = vadd.f32 0.0, %v795
  %797 = vmatprep.mubr.f32.mxu0 0.0
  %798 = vmatmul.mubr.f32.gmra.mrb[0].mxu0 %v503
  %v799 = vpop.f32.mrb[0].mxu0
  %v800 = vadd.f32 0.0, %v799
  %v801 = vpop.f32.mrb[0].mxu0
  %v802 = vadd.f32 0.0, %v801
  %803 = vmatprep.mubr.f32.mxu0 0.0
  %804 = vmatmul.mubr.f32.gmra.mrb[0].mxu0 %v506
  %v805 = vpop.f32.mrb[0].mxu0
  %v806 = vadd.f32 0.0, %v805
  %v807 = vpop.f32.mrb[0].mxu0
  %v808 = vadd.f32 0.0, %v807
  %809 = vmatprep.mubr.f32.mxu0 0.0
  %810 = vmatmul.mubr.f32.gmra.mrb[0].mxu0 %v509
  %v811 = vpop.f32.mrb[0].mxu0
  %v812 = vadd.f32 0.0, %v811
  %v813 = vpop.f32.mrb[0].mxu0
  %v814 = vadd.f32 0.0, %v813
  %815 = vmatprep.mubr.f32.mxu0 0.0
  %816 = vmatmul.mubr.f32.gmra.mrb[0].mxu0 %v512
  %v817 = vpop.f32.mrb[0].mxu0
  %v818 = vadd.f32 0.0, %v817
  %v819 = vpop.f32.mrb[0].mxu0
  %v820 = vadd.f32 0.0, %v819
  %821 = vmatprep.mubr.f32.mxu0 0.0
  %822 = vmatmul.mubr.f32.gmra.mrb[0].mxu0 %v515
  %v823 = vpop.f32.mrb[0].mxu0
  %v824 = vadd.f32 0.0, %v823
  %v825 = vpop.f32.mrb[0].mxu0
  %v826 = vadd.f32 0.0, %v825
  %827 = vmatprep.mubr.f32.mxu0 0.0
  %828 = vmatmul.mubr.f32.gmra.mrb[0].mxu0 %v518
  %v829 = vpop.f32.mrb[0].mxu0
  %v830 = vadd.f32 0.0, %v829
  %v831 = vpop.f32.mrb[0].mxu0
  %v832 = vadd.f32 0.0, %v831
  %833 = vmatprep.mubr.f32.mxu0 0.0
  %834 = vmatmul.mubr.f32.gmra.mrb[0].mxu0 %v521
  %v835 = vpop.f32.mrb[0].mxu0
  %v836 = vadd.f32 0.0, %v835
  %v837 = vpop.f32.mrb[0].mxu0
  %v838 = vadd.f32 0.0, %v837
  %839 = vmatprep.mubr.f32.mxu0 0.0
  %840 = vmatmul.mubr.f32.gmra.mrb[0].mxu0 %v524
  %v841 = vpop.f32.mrb[0].mxu0
  %v842 = vadd.f32 0.0, %v841
  %v843 = vpop.f32.mrb[0].mxu0
  %v844 = vadd.f32 0.0, %v843
  %845 = vmatprep.mubr.f32.mxu0 0.0
  %846 = vmatmul.mubr.f32.gmra.mrb[0].mxu0 %v527
  %v847 = vpop.f32.mrb[0].mxu0
  %v848 = vadd.f32 0.0, %v847
  %v849 = vpop.f32.mrb[0].mxu0
  %v850 = vadd.f32 0.0, %v849
  %851 = vmatprep.mubr.f32.mxu0 0.0
  %852 = vmatmul.mubr.f32.gmra.mrb[0].mxu0 %v530
  %v853 = vpop.f32.mrb[0].mxu0
  %v854 = vadd.f32 0.0, %v853
  %v855 = vpop.f32.mrb[0].mxu0
  %v856 = vadd.f32 0.0, %v855
  %857 = vmatprep.mubr.f32.mxu0 0.0
  %858 = vmatmul.mubr.f32.gmra.mrb[0].mxu0 %v533
  %v859 = vpop.f32.mrb[0].mxu0
  %v860 = vadd.f32 0.0, %v859
  %v861 = vpop.f32.mrb[0].mxu0
  %v862 = vadd.f32 0.0, %v861
  %863 = vmatprep.mubr.f32.mxu0 0.0
  %864 = vmatmul.mubr.f32.gmra.mrb[0].mxu0 %v536
  %v865 = vpop.f32.mrb[0].mxu0
  %v866 = vadd.f32 0.0, %v865
  %v867 = vpop.f32.mrb[0].mxu0
  %v868 = vadd.f32 0.0, %v867
  %869 = vmatprep.mubr.f32.mxu0 0.0
  %870 = vmatmul.mubr.f32.gmra.mrb[0].mxu0 %v539
  %v871 = vpop.f32.mrb[0].mxu0
  %v872 = vadd.f32 0.0, %v871
  %v873 = vpop.f32.mrb[0].mxu0
  %v874 = vadd.f32 0.0, %v873
  %875 = vmatprep.mubr.f32.mxu0 0.0
  %876 = vmatmul.mubr.f32.gmra.mrb[0].mxu0 %v542
  %v877 = vpop.f32.mrb[0].mxu0
  %v878 = vadd.f32 0.0, %v877
  %v879 = vpop.f32.mrb[0].mxu0
  %v880 = vadd.f32 0.0, %v879
  %881 = vmatprep.mubr.f32.mxu0 0.0
  %882 = vmatmul.mubr.f32.gmra.mrb[0].mxu0 %v545
  %v883 = vpop.f32.mrb[0].mxu0
  %v884 = vadd.f32 0.0, %v883
  %v885 = vpop.f32.mrb[0].mxu0
  %v886 = vadd.f32 0.0, %v885
  %887 = vmatprep.mubr.f32.mxu0 0.0
  %888 = vmatmul.mubr.f32.gmra.mrb[0].mxu0 %v548
  %v889 = vpop.f32.mrb[0].mxu0
  %v890 = vadd.f32 0.0, %v889
  %v891 = vpop.f32.mrb[0].mxu0
  %v892 = vadd.f32 0.0, %v891
  %893 = vmatprep.mubr.f32.mxu0 0.0
  %894 = vmatmul.mubr.f32.gmra.mrb[0].mxu0 %v551
  %v895 = vpop.f32.mrb[0].mxu0
  %v896 = vadd.f32 0.0, %v895
  %v897 = vpop.f32.mrb[0].mxu0
  %v898 = vadd.f32 0.0, %v897
  %899 = vmatprep.mubr.f32.mxu0 0.0
  %900 = vmatmul.mubr.f32.gmra.mrb[0].mxu0 %v554
  %v901 = vpop.f32.mrb[0].mxu0
  %v902 = vadd.f32 0.0, %v901
  %v903 = vpop.f32.mrb[0].mxu0
  %v904 = vadd.f32 0.0, %v903
  %905 = vmatprep.mubr.f32.mxu0 0.0
  %906 = vmatmul.mubr.f32.gmra.mrb[0].mxu0 %v557
  %v907 = vpop.f32.mrb[0].mxu0
  %v908 = vadd.f32 0.0, %v907
  %v909 = vpop.f32.mrb[0].mxu0
  %v910 = vadd.f32 0.0, %v909
  %911 = vdwg.mxu0
  %v912 = vld [vmem:[%s3] sm:$0xff]
  %v913 = vld [vmem:[%s3 + $0x8] sm:$0xff]
  %v914 = vld [vmem:[%s3 + $0x10] sm:$0xff]
  %v915 = vld [vmem:[%s3 + $0x18] sm:$0xff]
  %v916 = vld [vmem:[%s3 + $0x20] sm:$0xff]
  %v917 = vld [vmem:[%s3 + $0x28] sm:$0xff]
  %v918 = vld [vmem:[%s3 + $0x30] sm:$0xff]
  %v919 = vld [vmem:[%s3 + $0x38] sm:$0xff]
  %v920 = vld [vmem:[%s3 + $0x40] sm:$0xff]
  %v921 = vld [vmem:[%s3 + $0x48] sm:$0xff]
  %v922 = vld [vmem:[%s3 + $0x50] sm:$0xff]
  %v923 = vld [vmem:[%s3 + $0x58] sm:$0xff]
  %v924 = vld [vmem:[%s3 + $0x60] sm:$0xff]
  %v925 = vld [vmem:[%s3 + $0x68] sm:$0xff]
  %v926 = vld [vmem:[%s3 + $0x70] sm:$0xff]
  %v927 = vld [vmem:[%s3 + $0x78] sm:$0xff]
  %v928 = vld [vmem:[%s3 + $0x80] sm:$0xff]
  %v929 = vld [vmem:[%s3 + $0x88] sm:$0xff]
  %v930 = vld [vmem:[%s3 + $0x90] sm:$0xff]
  %v931 = vld [vmem:[%s3 + $0x98] sm:$0xff]
  %v932 = vld [vmem:[%s3 + $0xa0] sm:$0xff]
  %v933 = vld [vmem:[%s3 + $0xa8] sm:$0xff]
  %v934 = vld [vmem:[%s3 + $0xb0] sm:$0xff]
  %v935 = vld [vmem:[%s3 + $0xb8] sm:$0xff]
  %v936 = vld [vmem:[%s3 + $0xc0] sm:$0xff]
  %v937 = vld [vmem:[%s3 + $0xc8] sm:$0xff]
  %v938 = vld [vmem:[%s3 + $0xd0] sm:$0xff]
  %v939 = vld [vmem:[%s3 + $0xd8] sm:$0xff]
  %v940 = vld [vmem:[%s3 + $0xe0] sm:$0xff]
  %v941 = vld [vmem:[%s3 + $0xe8] sm:$0xff]
  %v942 = vld [vmem:[%s3 + $0xf0] sm:$0xff]
  %v943 = vld [vmem:[%s3 + $0xf8] sm:$0xff]
  %v944 = vld [vmem:[%s3 + $0x100] sm:$0xff]
  %v945 = vld [vmem:[%s3 + $0x108] sm:$0xff]
  %v946 = vld [vmem:[%s3 + $0x110] sm:$0xff]
  %v947 = vld [vmem:[%s3 + $0x118] sm:$0xff]
  %v948 = vld [vmem:[%s3 + $0x120] sm:$0xff]
  %v949 = vld [vmem:[%s3 + $0x128] sm:$0xff]
  %v950 = vld [vmem:[%s3 + $0x130] sm:$0xff]
  %v951 = vld [vmem:[%s3 + $0x138] sm:$0xff]
  %v952 = vld [vmem:[%s3 + $0x140] sm:$0xff]
  %v953 = vld [vmem:[%s3 + $0x148] sm:$0xff]
  %v954 = vld [vmem:[%s3 + $0x150] sm:$0xff]
  %v955 = vld [vmem:[%s3 + $0x158] sm:$0xff]
  %v956 = vld [vmem:[%s3 + $0x160] sm:$0xff]
  %v957 = vld [vmem:[%s3 + $0x168] sm:$0xff]
  %v958 = vld [vmem:[%s3 + $0x170] sm:$0xff]
  %v959 = vld [vmem:[%s3 + $0x178] sm:$0xff]
  %v960 = vmul.f32 %v912, %v121
  %v961 = vmul.f32 %v913, %v126
  %v962 = vmul.f32 %v914, %v131
  %v963 = vmul.f32 %v915, %v136
  %v964 = vmul.f32 %v916, %v141
  %v965 = vmul.f32 %v917, %v146
  %v966 = vmul.f32 %v918, %v151
  %v967 = vmul.f32 %v919, %v156
  %v968 = vmul.f32 %v920, %v161
  %v969 = vmul.f32 %v921, %v166
  %v970 = vmul.f32 %v922, %v171
  %v971 = vmul.f32 %v923, %v176
  %v972 = vmul.f32 %v924, %v181
  %v973 = vmul.f32 %v925, %v186
  %v974 = vmul.f32 %v926, %v191
  %v975 = vmul.f32 %v927, %v196
  %v976 = vmul.f32 %v928, %v201
  %v977 = vmul.f32 %v929, %v206
  %v978 = vmul.f32 %v930, %v211
  %v979 = vmul.f32 %v931, %v216
  %v980 = vmul.f32 %v932, %v221
  %v981 = vmul.f32 %v933, %v226
  %v982 = vmul.f32 %v934, %v231
  %v983 = vmul.f32 %v935, %v236
  %v984 = vmul.f32 %v936, %v241
  %v985 = vmul.f32 %v937, %v246
  %v986 = vmul.f32 %v938, %v251
  %v987 = vmul.f32 %v939, %v256
  %v988 = vmul.f32 %v940, %v261
  %v989 = vmul.f32 %v941, %v266
  %v990 = vmul.f32 %v942, %v271
  %v991 = vmul.f32 %v943, %v276
  %v992 = vmul.f32 %v944, %v281
  %v993 = vmul.f32 %v945, %v286
  %v994 = vmul.f32 %v946, %v291
  %v995 = vmul.f32 %v947, %v296
  %v996 = vmul.f32 %v948, %v301
  %v997 = vmul.f32 %v949, %v306
  %v998 = vmul.f32 %v950, %v311
  %v999 = vmul.f32 %v951, %v316
  %v1000 = vmul.f32 %v952, %v321
  %v1001 = vmul.f32 %v953, %v326
  %v1002 = vmul.f32 %v954, %v331
  %v1003 = vmul.f32 %v955, %v336
  %v1004 = vmul.f32 %v956, %v341
  %v1005 = vmul.f32 %v957, %v346
  %v1006 = vmul.f32 %v958, %v351
  %v1007 = vmul.f32 %v959, %v356
  %v1008 = vsub.f32 %v626, %v960
  %v1009 = vsub.f32 %v632, %v961
  %v1010 = vsub.f32 %v638, %v962
  %v1011 = vsub.f32 %v644, %v963
  %v1012 = vsub.f32 %v650, %v964
  %v1013 = vsub.f32 %v656, %v965
  %v1014 = vsub.f32 %v662, %v966
  %v1015 = vsub.f32 %v668, %v967
  %v1016 = vsub.f32 %v674, %v968
  %v1017 = vsub.f32 %v680, %v969
  %v1018 = vsub.f32 %v686, %v970
  %v1019 = vsub.f32 %v692, %v971
  %v1020 = vsub.f32 %v698, %v972
  %v1021 = vsub.f32 %v704, %v973
  %v1022 = vsub.f32 %v710, %v974
  %v1023 = vsub.f32 %v716, %v975
  %v1024 = vsub.f32 %v722, %v976
  %v1025 = vsub.f32 %v728, %v977
  %v1026 = vsub.f32 %v734, %v978
  %v1027 = vsub.f32 %v740, %v979
  %v1028 = vsub.f32 %v746, %v980
  %v1029 = vsub.f32 %v752, %v981
  %v1030 = vsub.f32 %v758, %v982
  %v1031 = vsub.f32 %v764, %v983
  %v1032 = vsub.f32 %v770, %v984
  %v1033 = vsub.f32 %v776, %v985
  %v1034 = vsub.f32 %v782, %v986
  %v1035 = vsub.f32 %v788, %v987
  %v1036 = vsub.f32 %v794, %v988
  %v1037 = vsub.f32 %v800, %v989
  %v1038 = vsub.f32 %v806, %v990
  %v1039 = vsub.f32 %v812, %v991
  %v1040 = vsub.f32 %v818, %v992
  %v1041 = vsub.f32 %v824, %v993
  %v1042 = vsub.f32 %v830, %v994
  %v1043 = vsub.f32 %v836, %v995
  %v1044 = vsub.f32 %v842, %v996
  %v1045 = vsub.f32 %v848, %v997
  %v1046 = vsub.f32 %v854, %v998
  %v1047 = vsub.f32 %v860, %v999
  %v1048 = vsub.f32 %v866, %v1000
  %v1049 = vsub.f32 %v872, %v1001
  %v1050 = vsub.f32 %v878, %v1002
  %v1051 = vsub.f32 %v884, %v1003
  %v1052 = vsub.f32 %v890, %v1004
  %v1053 = vsub.f32 %v896, %v1005
  %v1054 = vsub.f32 %v902, %v1006
  %v1055 = vsub.f32 %v908, %v1007
  %v1056 = vld [vmem:[%s4] sm:$0x1]
  %v1058 = vlaneseq
  %v1059 = vshrl.u32 %v1058, 7
  %v1060 = vsub.s32 0, %v1059
  %v1061 = vrot.slane %v1056, %v1060
  %v1063 = vadd.f32 %v1008, %v1061
  %v1064 = vadd.f32 %v1009, %v1061
  %v1065 = vadd.f32 %v1010, %v1061
  %v1066 = vadd.f32 %v1011, %v1061
  %v1067 = vadd.f32 %v1012, %v1061
  %v1068 = vadd.f32 %v1013, %v1061
  %v1069 = vadd.f32 %v1014, %v1061
  %v1070 = vadd.f32 %v1015, %v1061
  %v1071 = vadd.f32 %v1016, %v1061
  %v1072 = vadd.f32 %v1017, %v1061
  %v1073 = vadd.f32 %v1018, %v1061
  %v1074 = vadd.f32 %v1019, %v1061
  %v1075 = vadd.f32 %v1020, %v1061
  %v1076 = vadd.f32 %v1021, %v1061
  %v1077 = vadd.f32 %v1022, %v1061
  %v1078 = vadd.f32 %v1023, %v1061
  %v1079 = vadd.f32 %v1024, %v1061
  %v1080 = vadd.f32 %v1025, %v1061
  %v1081 = vadd.f32 %v1026, %v1061
  %v1082 = vadd.f32 %v1027, %v1061
  %v1083 = vadd.f32 %v1028, %v1061
  %v1084 = vadd.f32 %v1029, %v1061
  %v1085 = vadd.f32 %v1030, %v1061
  %v1086 = vadd.f32 %v1031, %v1061
  %v1087 = vadd.f32 %v1032, %v1061
  %v1088 = vadd.f32 %v1033, %v1061
  %v1089 = vadd.f32 %v1034, %v1061
  %v1090 = vadd.f32 %v1035, %v1061
  %v1091 = vadd.f32 %v1036, %v1061
  %v1092 = vadd.f32 %v1037, %v1061
  %v1093 = vadd.f32 %v1038, %v1061
  %v1094 = vadd.f32 %v1039, %v1061
  %v1095 = vadd.f32 %v1040, %v1061
  %v1096 = vadd.f32 %v1041, %v1061
  %v1097 = vadd.f32 %v1042, %v1061
  %v1098 = vadd.f32 %v1043, %v1061
  %v1099 = vadd.f32 %v1044, %v1061
  %v1100 = vadd.f32 %v1045, %v1061
  %v1101 = vadd.f32 %v1046, %v1061
  %v1102 = vadd.f32 %v1047, %v1061
  %v1103 = vadd.f32 %v1048, %v1061
  %v1104 = vadd.f32 %v1049, %v1061
  %v1105 = vadd.f32 %v1050, %v1061
  %v1106 = vadd.f32 %v1051, %v1061
  %v1107 = vadd.f32 %v1052, %v1061
  %v1108 = vadd.f32 %v1053, %v1061
  %v1109 = vadd.f32 %v1054, %v1061
  %v1110 = vadd.f32 %v1055, %v1061
  %1111 = vst [vmem:[%s5] sm:$0xff] %v1063
  %1112 = vst [vmem:[%s5 + $0x8] sm:$0xff] %v1064
  %1113 = vst [vmem:[%s5 + $0x10] sm:$0xff] %v1065
  %1114 = vst [vmem:[%s5 + $0x18] sm:$0xff] %v1066
  %1115 = vst [vmem:[%s5 + $0x20] sm:$0xff] %v1067
  %1116 = vst [vmem:[%s5 + $0x28] sm:$0xff] %v1068
  %1117 = vst [vmem:[%s5 + $0x30] sm:$0xff] %v1069
  %1118 = vst [vmem:[%s5 + $0x38] sm:$0xff] %v1070
  %1119 = vst [vmem:[%s5 + $0x40] sm:$0xff] %v1071
  %1120 = vst [vmem:[%s5 + $0x48] sm:$0xff] %v1072
  %1121 = vst [vmem:[%s5 + $0x50] sm:$0xff] %v1073
  %1122 = vst [vmem:[%s5 + $0x58] sm:$0xff] %v1074
  %1123 = vst [vmem:[%s5 + $0x60] sm:$0xff] %v1075
  %1124 = vst [vmem:[%s5 + $0x68] sm:$0xff] %v1076
  %1125 = vst [vmem:[%s5 + $0x70] sm:$0xff] %v1077
  %1126 = vst [vmem:[%s5 + $0x78] sm:$0xff] %v1078
  %1127 = vst [vmem:[%s5 + $0x80] sm:$0xff] %v1079
  %1128 = vst [vmem:[%s5 + $0x88] sm:$0xff] %v1080
  %1129 = vst [vmem:[%s5 + $0x90] sm:$0xff] %v1081
  %1130 = vst [vmem:[%s5 + $0x98] sm:$0xff] %v1082
  %1131 = vst [vmem:[%s5 + $0xa0] sm:$0xff] %v1083
  %1132 = vst [vmem:[%s5 + $0xa8] sm:$0xff] %v1084
  %1133 = vst [vmem:[%s5 + $0xb0] sm:$0xff] %v1085
  %1134 = vst [vmem:[%s5 + $0xb8] sm:$0xff] %v1086
  %1135 = vst [vmem:[%s5 + $0xc0] sm:$0xff] %v1087
  %1136 = vst [vmem:[%s5 + $0xc8] sm:$0xff] %v1088
  %1137 = vst [vmem:[%s5 + $0xd0] sm:$0xff] %v1089
  %1138 = vst [vmem:[%s5 + $0xd8] sm:$0xff] %v1090
  %1139 = vst [vmem:[%s5 + $0xe0] sm:$0xff] %v1091
  %1140 = vst [vmem:[%s5 + $0xe8] sm:$0xff] %v1092
  %1141 = vst [vmem:[%s5 + $0xf0] sm:$0xff] %v1093
  %1142 = vst [vmem:[%s5 + $0xf8] sm:$0xff] %v1094
  %1143 = vst [vmem:[%s5 + $0x100] sm:$0xff] %v1095
  %1144 = vst [vmem:[%s5 + $0x108] sm:$0xff] %v1096
  %1145 = vst [vmem:[%s5 + $0x110] sm:$0xff] %v1097
  %1146 = vst [vmem:[%s5 + $0x118] sm:$0xff] %v1098
  %1147 = vst [vmem:[%s5 + $0x120] sm:$0xff] %v1099
  %1148 = vst [vmem:[%s5 + $0x128] sm:$0xff] %v1100
  %1149 = vst [vmem:[%s5 + $0x130] sm:$0xff] %v1101
  %1150 = vst [vmem:[%s5 + $0x138] sm:$0xff] %v1102
  %1151 = vst [vmem:[%s5 + $0x140] sm:$0xff] %v1103
  %1152 = vst [vmem:[%s5 + $0x148] sm:$0xff] %v1104
  %1153 = vst [vmem:[%s5 + $0x150] sm:$0xff] %v1105
  %1154 = vst [vmem:[%s5 + $0x158] sm:$0xff] %v1106
  %1155 = vst [vmem:[%s5 + $0x160] sm:$0xff] %v1107
  %1156 = vst [vmem:[%s5 + $0x168] sm:$0xff] %v1108
  %1157 = vst [vmem:[%s5 + $0x170] sm:$0xff] %v1109
  %1158 = vst [vmem:[%s5 + $0x178] sm:$0xff] %v1110
  %v1159 = vpack.c.bf16 %v634, %v628
  %v1160 = vpack.c.bf16 %v646, %v640
  %v1161 = vpack.c.bf16 %v658, %v652
  %v1162 = vpack.c.bf16 %v670, %v664
  %v1163 = vpack.c.bf16 %v682, %v676
  %v1164 = vpack.c.bf16 %v694, %v688
  %v1165 = vpack.c.bf16 %v706, %v700
  %v1166 = vpack.c.bf16 %v718, %v712
  %v1167 = vpack.c.bf16 %v730, %v724
  %v1168 = vpack.c.bf16 %v742, %v736
  %v1169 = vpack.c.bf16 %v754, %v748
  %v1170 = vpack.c.bf16 %v766, %v760
  %v1171 = vpack.c.bf16 %v778, %v772
  %v1172 = vpack.c.bf16 %v790, %v784
  %v1173 = vpack.c.bf16 %v802, %v796
  %v1174 = vpack.c.bf16 %v814, %v808
  %v1175 = vpack.c.bf16 %v826, %v820
  %v1176 = vpack.c.bf16 %v838, %v832
  %v1177 = vpack.c.bf16 %v850, %v844
  %v1178 = vpack.c.bf16 %v862, %v856
  %v1179 = vpack.c.bf16 %v874, %v868
  %v1180 = vpack.c.bf16 %v886, %v880
  %v1181 = vpack.c.bf16 %v898, %v892
  %v1182 = vpack.c.bf16 %v910, %v904
  %v1207 = vunpack.c.l.b16 %v1159
  %v1208 = vunpack.c.h.b16 %v1159
  %v1209 = vunpack.c.l.b16 %v1160
  %v1210 = vunpack.c.h.b16 %v1160
  %v1211 = vunpack.c.l.b16 %v1161
  %v1212 = vunpack.c.h.b16 %v1161
  %v1213 = vunpack.c.l.b16 %v1162
  %v1214 = vunpack.c.h.b16 %v1162
  %v1215 = vunpack.c.l.b16 %v1163
  %v1216 = vunpack.c.h.b16 %v1163
  %v1217 = vunpack.c.l.b16 %v1164
  %v1218 = vunpack.c.h.b16 %v1164
  %v1219 = vunpack.c.l.b16 %v1165
  %v1220 = vunpack.c.h.b16 %v1165
  %v1221 = vunpack.c.l.b16 %v1166
  %v1222 = vunpack.c.h.b16 %v1166
  %v1223 = vunpack.c.l.b16 %v1167
  %v1224 = vunpack.c.h.b16 %v1167
  %v1225 = vunpack.c.l.b16 %v1168
  %v1226 = vunpack.c.h.b16 %v1168
  %v1227 = vunpack.c.l.b16 %v1169
  %v1228 = vunpack.c.h.b16 %v1169
  %v1229 = vunpack.c.l.b16 %v1170
  %v1230 = vunpack.c.h.b16 %v1170
  %v1231 = vunpack.c.l.b16 %v1171
  %v1232 = vunpack.c.h.b16 %v1171
  %v1233 = vunpack.c.l.b16 %v1172
  %v1234 = vunpack.c.h.b16 %v1172
  %v1235 = vunpack.c.l.b16 %v1173
  %v1236 = vunpack.c.h.b16 %v1173
  %v1237 = vunpack.c.l.b16 %v1174
  %v1238 = vunpack.c.h.b16 %v1174
  %v1239 = vunpack.c.l.b16 %v1175
  %v1240 = vunpack.c.h.b16 %v1175
  %v1241 = vunpack.c.l.b16 %v1176
  %v1242 = vunpack.c.h.b16 %v1176
  %v1243 = vunpack.c.l.b16 %v1177
  %v1244 = vunpack.c.h.b16 %v1177
  %v1245 = vunpack.c.l.b16 %v1178
  %v1246 = vunpack.c.h.b16 %v1178
  %v1247 = vunpack.c.l.b16 %v1179
  %v1248 = vunpack.c.h.b16 %v1179
  %v1249 = vunpack.c.l.b16 %v1180
  %v1250 = vunpack.c.h.b16 %v1180
  %v1251 = vunpack.c.l.b16 %v1181
  %v1252 = vunpack.c.h.b16 %v1181
  %v1253 = vunpack.c.l.b16 %v1182
  %v1254 = vunpack.c.h.b16 %v1182
  %v1255 = vpack.c.b16 %v1207, %v1207
  %v1256 = vpack.c.b16 %v1208, %v1208
  %v1257 = vpack.c.b16 %v1209, %v1209
  %v1258 = vpack.c.b16 %v1210, %v1210
  %v1259 = vpack.c.b16 %v1211, %v1211
  %v1260 = vpack.c.b16 %v1212, %v1212
  %v1261 = vpack.c.b16 %v1213, %v1213
  %v1262 = vpack.c.b16 %v1214, %v1214
  %v1263 = vpack.c.b16 %v1215, %v1215
  %v1264 = vpack.c.b16 %v1216, %v1216
  %v1265 = vpack.c.b16 %v1217, %v1217
  %v1266 = vpack.c.b16 %v1218, %v1218
  %v1267 = vpack.c.b16 %v1219, %v1219
  %v1268 = vpack.c.b16 %v1220, %v1220
  %v1269 = vpack.c.b16 %v1221, %v1221
  %v1270 = vpack.c.b16 %v1222, %v1222
  %v1271 = vpack.c.b16 %v1223, %v1223
  %v1272 = vpack.c.b16 %v1224, %v1224
  %v1273 = vpack.c.b16 %v1225, %v1225
  %v1274 = vpack.c.b16 %v1226, %v1226
  %v1275 = vpack.c.b16 %v1227, %v1227
  %v1276 = vpack.c.b16 %v1228, %v1228
  %v1277 = vpack.c.b16 %v1229, %v1229
  %v1278 = vpack.c.b16 %v1230, %v1230
  %v1279 = vpack.c.b16 %v1231, %v1231
  %v1280 = vpack.c.b16 %v1232, %v1232
  %v1281 = vpack.c.b16 %v1233, %v1233
  %v1282 = vpack.c.b16 %v1234, %v1234
  %v1283 = vpack.c.b16 %v1235, %v1235
  %v1284 = vpack.c.b16 %v1236, %v1236
  %v1285 = vpack.c.b16 %v1237, %v1237
  %v1286 = vpack.c.b16 %v1238, %v1238
  %v1287 = vpack.c.b16 %v1239, %v1239
  %v1288 = vpack.c.b16 %v1240, %v1240
  %v1289 = vpack.c.b16 %v1241, %v1241
  %v1290 = vpack.c.b16 %v1242, %v1242
  %v1291 = vpack.c.b16 %v1243, %v1243
  %v1292 = vpack.c.b16 %v1244, %v1244
  %v1293 = vpack.c.b16 %v1245, %v1245
  %v1294 = vpack.c.b16 %v1246, %v1246
  %v1295 = vpack.c.b16 %v1247, %v1247
  %v1296 = vpack.c.b16 %v1248, %v1248
  %v1297 = vpack.c.b16 %v1249, %v1249
  %v1298 = vpack.c.b16 %v1250, %v1250
  %v1299 = vpack.c.b16 %v1251, %v1251
  %v1300 = vpack.c.b16 %v1252, %v1252
  %v1301 = vpack.c.b16 %v1253, %v1253
  %v1302 = vpack.c.b16 %v1254, %v1254
  %1351 = vst [vmem:[%s6] sm:$0xf] %v1255
  %1352 = vst [vmem:[%s6 + $0x4] sm:$0xf] %v1256
  %1353 = vst [vmem:[%s6 + $0x8] sm:$0xf] %v1257
  %1354 = vst [vmem:[%s6 + $0xc] sm:$0xf] %v1258
  %1355 = vst [vmem:[%s6 + $0x10] sm:$0xf] %v1259
  %1356 = vst [vmem:[%s6 + $0x14] sm:$0xf] %v1260
  %1357 = vst [vmem:[%s6 + $0x18] sm:$0xf] %v1261
  %1358 = vst [vmem:[%s6 + $0x1c] sm:$0xf] %v1262
  %1359 = vst [vmem:[%s6 + $0x20] sm:$0xf] %v1263
  %1360 = vst [vmem:[%s6 + $0x24] sm:$0xf] %v1264
  %1361 = vst [vmem:[%s6 + $0x28] sm:$0xf] %v1265
  %1362 = vst [vmem:[%s6 + $0x2c] sm:$0xf] %v1266
  %1363 = vst [vmem:[%s6 + $0x30] sm:$0xf] %v1267
  %1364 = vst [vmem:[%s6 + $0x34] sm:$0xf] %v1268
  %1365 = vst [vmem:[%s6 + $0x38] sm:$0xf] %v1269
  %1366 = vst [vmem:[%s6 + $0x3c] sm:$0xf] %v1270
  %1367 = vst [vmem:[%s6 + $0x40] sm:$0xf] %v1271
  %1368 = vst [vmem:[%s6 + $0x44] sm:$0xf] %v1272
  %1369 = vst [vmem:[%s6 + $0x48] sm:$0xf] %v1273
  %1370 = vst [vmem:[%s6 + $0x4c] sm:$0xf] %v1274
  %1371 = vst [vmem:[%s6 + $0x50] sm:$0xf] %v1275
  %1372 = vst [vmem:[%s6 + $0x54] sm:$0xf] %v1276
  %1373 = vst [vmem:[%s6 + $0x58] sm:$0xf] %v1277
  %1374 = vst [vmem:[%s6 + $0x5c] sm:$0xf] %v1278
  %1375 = vst [vmem:[%s6 + $0x60] sm:$0xf] %v1279
  %1376 = vst [vmem:[%s6 + $0x64] sm:$0xf] %v1280
  %1377 = vst [vmem:[%s6 + $0x68] sm:$0xf] %v1281
  %1378 = vst [vmem:[%s6 + $0x6c] sm:$0xf] %v1282
  %1379 = vst [vmem:[%s6 + $0x70] sm:$0xf] %v1283
  %1380 = vst [vmem:[%s6 + $0x74] sm:$0xf] %v1284
  %1381 = vst [vmem:[%s6 + $0x78] sm:$0xf] %v1285
  %1382 = vst [vmem:[%s6 + $0x7c] sm:$0xf] %v1286
  %1383 = vst [vmem:[%s6 + $0x80] sm:$0xf] %v1287
  %1384 = vst [vmem:[%s6 + $0x84] sm:$0xf] %v1288
  %1385 = vst [vmem:[%s6 + $0x88] sm:$0xf] %v1289
  %1386 = vst [vmem:[%s6 + $0x8c] sm:$0xf] %v1290
  %1387 = vst [vmem:[%s6 + $0x90] sm:$0xf] %v1291
  %1388 = vst [vmem:[%s6 + $0x94] sm:$0xf] %v1292
  %1389 = vst [vmem:[%s6 + $0x98] sm:$0xf] %v1293
  %1390 = vst [vmem:[%s6 + $0x9c] sm:$0xf] %v1294
  %1391 = vst [vmem:[%s6 + $0xa0] sm:$0xf] %v1295
  %1392 = vst [vmem:[%s6 + $0xa4] sm:$0xf] %v1296
  %1393 = vst [vmem:[%s6 + $0xa8] sm:$0xf] %v1297
  %1394 = vst [vmem:[%s6 + $0xac] sm:$0xf] %v1298
  %1395 = vst [vmem:[%s6 + $0xb0] sm:$0xf] %v1299
  %1396 = vst [vmem:[%s6 + $0xb4] sm:$0xf] %v1300
  %1397 = vst [vmem:[%s6 + $0xb8] sm:$0xf] %v1301
  %1398 = vst [vmem:[%s6 + $0xbc] sm:$0xf] %v1302
  // Predicated region
  $region22: #{compgcn_forward.2} parent=0 // pred_check
    _
  $region23: #{compgcn_forward.2} parent=0 // pred_check_branch
    %1400 = sbr.rel (0) target = $region25
  $region24: #{compgcn_forward.2} parent=0 // pred_region
    _
  $region25: #{compgcn_forward.2} parent=0 // pred_fallthru
    _
  // Predicated region
  $region26: #{compgcn_forward.2} parent=0 // pred_check
    _
  $region27: #{compgcn_forward.2} parent=0 // pred_check_branch
    %1402 = sbr.rel (0) target = $region29
  $region28: #{compgcn_forward.2} parent=0 // pred_region
    _
  $region29: #{compgcn_forward.2} parent=0 // pred_fallthru
    _
  // Predicated region
  $region30: #{compgcn_forward.2} parent=0 // pred_check
    _
  $region31: #{compgcn_forward.2} parent=0 // pred_check_branch
    %1404 = sbr.rel (0) target = $region33
  $region32: #{compgcn_forward.2} parent=0 // pred_region
    _
  $region33: #{compgcn_forward.2} parent=0 // pred_fallthru
    _
  // Predicated region
  $region34: #{compgcn_forward.2} parent=0 // pred_check
    _
  $region35: #{compgcn_forward.2} parent=0 // pred_check_branch
    %1406 = sbr.rel (0) target = $region37
  $region36: #{compgcn_forward.2} parent=0 // pred_region
    _
  $region37: #{compgcn_forward.2} parent=0 // pred_fallthru
    _

</llo_original>
